<compile_context>
chip_gen: v6e
topology: v6e:2x2x1
jax: 0.10.0
libtpu: 0.0.40
codegen_flags: <defaults>
</compile_context>

<pallas_src>
import functools
import math

import jax
import jax.numpy as jnp
from jax import lax
from jax.experimental import pallas as pl
from jax.experimental.pallas import tpu as pltpu


# ----------------------------- model config -------------------------------- #

CFG = dict(
    vocab_size=50,
    type_vocab_size=2,
    max_position=16,
    hidden=32,
    num_heads=2,
    intermediate=64,
    num_layers=2,
    num_labels=2,
)

LANE = 128           # both outputs are padded to lane-dense 128-wide slabs
NEG_BIAS = -1e4      # HF-style additive attention-mask value
LN_EPS = 1e-12


# ----------------------------- fused Pallas kernel ------------------------- #

def _layer_norm(x, g, b, eps):
    # x: (R, H) f32, g/b: (1, H) f32
    mu = jnp.mean(x, axis=-1, keepdims=True)
    xc = x - mu
    var = jnp.mean(xc * xc, axis=-1, keepdims=True)
    return xc * lax.rsqrt(var + eps) * g + b


def _bert_fused_kernel(x_ref, mask_ref,
                       eg_ref, eb_ref,
                       wqkv_ref, bqkv_ref, wo_ref, bo_ref, ag_ref, ab_ref,
                       w1_ref, b1_ref, w2_ref, b2_ref, fg_ref, fb_ref,
                       cw_ref, cb_ref,
                       logits_ref, cls_ref,
                       *, bb, seq, num_layers, num_heads, head_dim, ln_eps):
    """One batch block (bb samples) per grid step; everything resident in VMEM."""
    H = num_heads * head_dim
    R = bb * seq
    bf16 = jnp.bfloat16

    # ---- embedding LayerNorm on the whole (R, H) row slab ----
    x = x_ref[...].astype(jnp.float32).reshape(R, H)
    x = _layer_norm(x, eg_ref[...], eb_ref[...], ln_eps)

    # ---- additive attention bias per sample; (1,S)->(S,S) broadcast hoisted ----
    bias = (1.0 - mask_ref[...].astype(jnp.float32)) * NEG_BIAS            # (bb, 1, S)
    bias_b = [jnp.broadcast_to(bias[b], (seq, seq)) for b in range(bb)]    # bb x (S, S)

    for l in range(num_layers):
        # fused QKV: per-head [q|k|v] column layout, 1/sqrt(d) pre-folded into q,
        # bf16 weights (pre-cast at init) with f32 accumulation.
        qkv = jnp.dot(x.astype(bf16), wqkv_ref[l],
                      preferred_element_type=jnp.float32) + bqkv_ref[l]    # (R, 3H)

        ctx_rows = []
        for b in range(bb):
            rs = b * seq
            head_ctx = []
            for h in range(num_heads):
                base = h * 3 * head_dim
                q = qkv[rs:rs + seq, base:base + head_dim].astype(bf16)
                k = qkv[rs:rs + seq, base + head_dim:base + 2 * head_dim].astype(bf16)
                v = qkv[rs:rs + seq, base + 2 * head_dim:base + 3 * head_dim].astype(bf16)

                s = lax.dot_general(q, k, (((1,), (1,)), ((), ())),
                                    preferred_element_type=jnp.float32)    # (S, S)
                s = s + bias_b[b]
                m = jnp.max(s, axis=-1, keepdims=True)
                p = jnp.exp(s - m)
                p = p * pl.reciprocal(jnp.sum(p, axis=-1, keepdims=True), approx=True)

                head_ctx.append(jnp.dot(p.astype(bf16), v,
                                        preferred_element_type=jnp.float32))  # (S, d)
            ctx_rows.append(jnp.concatenate(head_ctx, axis=-1))            # (S, H)
        ctx = jnp.concatenate(ctx_rows, axis=0)                            # (R, H)

        # single lane-concatenated output projection (replaces per-head matmuls)
        attn = jnp.dot(ctx.astype(bf16), wo_ref[l],
                       preferred_element_type=jnp.float32) + bo_ref[l]
        x = _layer_norm(attn + x, ag_ref[l], ab_ref[l], ln_eps)

        # --- feed-forward ---
        h1 = jnp.dot(x.astype(bf16), w1_ref[l],
                     preferred_element_type=jnp.float32) + b1_ref[l]       # (R, I)
        # TODO(synk): HF BertModel uses exact erf GELU; tanh approximation used here.
        h1 = jax.nn.gelu(h1, approximate=True)
        ffn = jnp.dot(h1.astype(bf16), w2_ref[l],
                      preferred_element_type=jnp.float32) + b2_ref[l]      # (R, H)
        x = _layer_norm(ffn + x, fg_ref[l], fb_ref[l], ln_eps)

    # ---- CLS rows + lane-dense (128-wide) outputs ----
    cls_rows = jnp.concatenate([x[b * seq:b * seq + 1, :] for b in range(bb)],
                               axis=0)                                      # (bb, H)
    logits = jnp.dot(cls_rows.astype(bf16), cw_ref[...],
                     preferred_element_type=jnp.float32) + cb_ref[...]      # (bb, LANE)
    cls_pad = jnp.concatenate(
        [cls_rows, jnp.zeros((bb, LANE - H), jnp.float32)], axis=-1)        # (bb, LANE)

    logits_ref[...] = logits.reshape(bb, 1, LANE).astype(logits_ref.dtype)
    cls_ref[...] = cls_pad.reshape(bb, 1, LANE).astype(cls_ref.dtype)


# ----------------------------- parameters ---------------------------------- #

def init_params(key, cfg):
    H, I, L = cfg["hidden"], cfg["intermediate"], cfg["num_layers"]
    nH = cfg["num_heads"]
    d = H // nH
    std = 0.02
    scale = 1.0 / math.sqrt(d)
    bf16 = jnp.bfloat16

    def nrm(k, shape):
        return jax.random.normal(k, shape, jnp.float32) * std

    keys = iter(jax.random.split(key, 16 + 8 * L))
    p = {
        "word_emb": nrm(next(keys), (cfg["vocab_size"], H)),
        "pos_emb": nrm(next(keys), (cfg["max_position"], H)),
        "type_emb": nrm(next(keys), (cfg["type_vocab_size"], H)),
        "emb_ln_g": jnp.ones((1, H), jnp.float32),
        "emb_ln_b": jnp.zeros((1, H), jnp.float32),
    }

    wqkv, bqkv, wo, bo, ag, ab, w1, b1, w2, b2, fg, fb = ([] for _ in range(12))
    for _ in range(L):
        wq, wk, wv = (nrm(next(keys), (H, H)) for _ in range(3))
        # Per-head contiguous [q|k|v] column layout; 1/sqrt(d) folded into q.
        # (Q/K/V biases are zero here; a nonzero q bias must also be scaled and
        #  laid out per-head in the same order.)
        blocks = []
        for h in range(nH):
            lo, hi = h * d, (h + 1) * d
            blocks += [wq[:, lo:hi] * scale, wk[:, lo:hi], wv[:, lo:hi]]
        wqkv.append(jnp.concatenate(blocks, axis=1))                 # (H, 3H)
        bqkv.append(jnp.zeros((1, 3 * H), jnp.float32))
        wo.append(nrm(next(keys), (H, H)))
        bo.append(jnp.zeros((1, H), jnp.float32))
        ag.append(jnp.ones((1, H), jnp.float32))
        ab.append(jnp.zeros((1, H), jnp.float32))
        w1.append(nrm(next(keys), (H, I)))
        b1.append(jnp.zeros((1, I), jnp.float32))
        w2.append(nrm(next(keys), (I, H)))
        b2.append(jnp.zeros((1, H), jnp.float32))
        fg.append(jnp.ones((1, H), jnp.float32))
        fb.append(jnp.zeros((1, H), jnp.float32))

    # Matmul weights pre-cast to bf16 (halves weight DMA, removes per-step casts);
    # biases / LayerNorm params stay f32 (added/applied post-matmul in f32).
    p.update(
        wqkv=jnp.stack(wqkv).astype(bf16), bqkv=jnp.stack(bqkv),
        wo=jnp.stack(wo).astype(bf16), bo=jnp.stack(bo),
        attn_ln_g=jnp.stack(ag), attn_ln_b=jnp.stack(ab),
        w1=jnp.stack(w1).astype(bf16), b1=jnp.stack(b1),
        w2=jnp.stack(w2).astype(bf16), b2=jnp.stack(b2),
        ffn_ln_g=jnp.stack(fg), ffn_ln_b=jnp.stack(fb),
    )

    # classifier Linear(H, 2): weight ~ N(0, 0.02), bias 0; pad to 128 lanes
    cls_w = nrm(next(keys), (H, cfg["num_labels"]))
    cls_b = jnp.zeros((cfg["num_labels"],), jnp.float32)
    p["cls_w_pad"] = (jnp.zeros((H, LANE), jnp.float32)
                      .at[:, :cfg["num_labels"]].set(cls_w).astype(bf16))
    p["cls_b_pad"] = jnp.zeros((1, LANE), jnp.float32).at[0, :cfg["num_labels"]].set(cls_b)
    return p


# ----------------------------- forward pass -------------------------------- #

def _pick_batch_block(B):
    """v7x has 2 TensorCores/chip -> keep a core-parallel batch axis; single-TC
    chips (v5e/v6e) get one grid step (all rows) to avoid per-step overhead."""
    try:
        kind = jax.devices()[0].device_kind.lower()
    except Exception:
        kind = ""
    if "v7" in kind and B % 2 == 0:
        return B // 2
    return B


def sentiment_bert_forward(params, input_ids, attn_mask, token_type_ids, cfg,
                           batch_block=None):
    B, S = input_ids.shape
    H = cfg["hidden"]
    nH = cfg["num_heads"]
    d = H // nH
    L = cfg["num_layers"]
    I = cfg["intermediate"]
    BB = batch_block if batch_block is not None else _pick_batch_block(B)
    assert B % BB == 0
    steps = B // BB

    # ---- embeddings (gathers are plain-JAX glue) ----
    pos_ids = jnp.arange(S, dtype=jnp.int32)
    x_emb = (jnp.take(params["word_emb"], input_ids, axis=0)
             + jnp.take(params["pos_emb"], pos_ids, axis=0)[None, :, :]
             + jnp.take(params["type_emb"], token_type_ids, axis=0))          # (B, S, H)
    mask_f = attn_mask.astype(jnp.float32).reshape(B, 1, S)                   # (B, 1, S)

    def full(shape):
        return pl.BlockSpec(shape, lambda i: (0,) * len(shape))

    def per_step(shape):
        return pl.BlockSpec(shape, lambda i: (i,) + (0,) * (len(shape) - 1))

    kernel = functools.partial(
        _bert_fused_kernel, bb=BB, seq=S, num_layers=L, num_heads=nH,
        head_dim=d, ln_eps=LN_EPS)

    # TODO(synk): at real BERT sizes, stream per-layer weights via a second
    #             'arbitrary' grid axis instead of keeping all L layers resident
    #             (required for v7x's 64 MiB VMEM); at this toy size (~100 KB)
    #             the all-resident layout is both smaller and faster.
    logits_pad, cls_pad = pl.pallas_call(
        kernel,
        out_shape=(jax.ShapeDtypeStruct((B, 1, LANE), jnp.float32),
                   jax.ShapeDtypeStruct((B, 1, LANE), jnp.float32)),
        grid=(steps,),
        in_specs=[
            per_step((BB, S, H)),                       # x_emb
            per_step((BB, 1, S)),                       # attention mask (0/1)
            full((1, H)), full((1, H)),                 # embedding LN
            full((L, H, 3 * H)), full((L, 1, 3 * H)),   # fused per-head QKV (bf16 W)
            full((L, H, H)), full((L, 1, H)),           # attn out proj
            full((L, 1, H)), full((L, 1, H)),           # attn LN
            full((L, H, I)), full((L, 1, I)),           # FFN w1
            full((L, I, H)), full((L, 1, H)),           # FFN w2
            full((L, 1, H)), full((L, 1, H)),           # FFN LN
            full((H, LANE)), full((1, LANE)),           # classifier (lane-padded)
        ],
        out_specs=(per_step((BB, 1, LANE)), per_step((BB, 1, LANE))),
        compiler_params=pltpu.CompilerParams(
            dimension_semantics=("parallel",)),         # batch axis -> 2 TCs on v7x
    )(x_emb, mask_f,
      params["emb_ln_g"], params["emb_ln_b"],
      params["wqkv"], params["bqkv"], params["wo"], params["bo"],
      params["attn_ln_g"], params["attn_ln_b"],
      params["w1"], params["b1"], params["w2"], params["b2"],
      params["ffn_ln_g"], params["ffn_ln_b"],
      params["cls_w_pad"], params["cls_b_pad"])

    start_logits = logits_pad.reshape(B, LANE)[:, :cfg["num_labels"]]
    all_sentence_v = cls_pad.reshape(B, LANE)[:, :H]
    # TODO(synk): nn.Dropout(0.5) is identity at inference; training-mode dropout
    #             is not implemented.
    return start_logits, all_sentence_v


# ----------------------------- main ----------------------------------------- #

if __name__ == "__main__":
    key = jax.random.PRNGKey(0)
    k_par, k_ids, k_typ = jax.random.split(key, 3)

    B, S = 2, 8
    params = init_params(k_par, CFG)

    input_ids = jax.random.randint(k_ids, (B, S), 0, CFG["vocab_size"], jnp.int32)
    token_type_ids = jax.random.randint(k_typ, (B, S), 0, CFG["type_vocab_size"],
                                        jnp.int32)
    # mask out the last two tokens of sample 1
    attn_mask = jnp.ones((B, S), jnp.int32).at[1, -2:].set(0)

    fwd = jax.jit(functools.partial(sentiment_bert_forward, cfg=CFG))
    start_logits, all_sentence_v = fwd(params, input_ids, attn_mask, token_type_ids)
    jax.block_until_ready((start_logits, all_sentence_v))

    assert start_logits.shape == (B, CFG["num_labels"])
    assert all_sentence_v.shape == (B, CFG["hidden"])
    assert bool(jnp.all(jnp.isfinite(start_logits)))
    assert bool(jnp.all(jnp.isfinite(all_sentence_v)))
    print("KERNEL_OK")
</pallas_src>

<mosaic_0001>
module attributes {stable_mosaic.version = 11 : i64} {
  func.func @_bert_fused_kernel(%arg0: i32, %arg1: memref<2x8x32xf32, #tpu.memory_space<vmem>>, %arg2: memref<2x1x8xf32, #tpu.memory_space<vmem>>, %arg3: memref<1x32xf32, #tpu.memory_space<vmem>>, %arg4: memref<1x32xf32, #tpu.memory_space<vmem>>, %arg5: memref<2x32x96xbf16, #tpu.memory_space<vmem>>, %arg6: memref<2x1x96xf32, #tpu.memory_space<vmem>>, %arg7: memref<2x32x32xbf16, #tpu.memory_space<vmem>>, %arg8: memref<2x1x32xf32, #tpu.memory_space<vmem>>, %arg9: memref<2x1x32xf32, #tpu.memory_space<vmem>>, %arg10: memref<2x1x32xf32, #tpu.memory_space<vmem>>, %arg11: memref<2x32x64xbf16, #tpu.memory_space<vmem>>, %arg12: memref<2x1x64xf32, #tpu.memory_space<vmem>>, %arg13: memref<2x64x32xbf16, #tpu.memory_space<vmem>>, %arg14: memref<2x1x32xf32, #tpu.memory_space<vmem>>, %arg15: memref<2x1x32xf32, #tpu.memory_space<vmem>>, %arg16: memref<2x1x32xf32, #tpu.memory_space<vmem>>, %arg17: memref<32x128xbf16, #tpu.memory_space<vmem>>, %arg18: memref<1x128xf32, #tpu.memory_space<vmem>>, %arg19: memref<2x1x128xf32, #tpu.memory_space<vmem>>, %arg20: memref<2x1x128xf32, #tpu.memory_space<vmem>>) attributes {dimension_semantics = [#tpu.dimension_semantics<parallel>], iteration_bounds = array<i64: 1>, scalar_prefetch = 0 : i64, scratch_operands = 0 : i64, tpu.core_type = #tpu.core_type<tc>, window_params = [{transform_indices = @transform_0, window_bounds = array<i64: 2, 8, 32>}, {transform_indices = @transform_1, window_bounds = array<i64: 2, 1, 8>}, {pipeline_mode = #tpu.pipeline_mode<synchronous>, transform_indices = @transform_2, window_bounds = array<i64: 1, 32>}, {pipeline_mode = #tpu.pipeline_mode<synchronous>, transform_indices = @transform_3, window_bounds = array<i64: 1, 32>}, {pipeline_mode = #tpu.pipeline_mode<synchronous>, transform_indices = @transform_4, window_bounds = array<i64: 2, 32, 96>}, {pipeline_mode = #tpu.pipeline_mode<synchronous>, transform_indices = @transform_5, window_bounds = array<i64: 2, 1, 96>}, {pipeline_mode = #tpu.pipeline_mode<synchronous>, transform_indices = @transform_6, window_bounds = array<i64: 2, 32, 32>}, {pipeline_mode = #tpu.pipeline_mode<synchronous>, transform_indices = @transform_7, window_bounds = array<i64: 2, 1, 32>}, {pipeline_mode = #tpu.pipeline_mode<synchronous>, transform_indices = @transform_8, window_bounds = array<i64: 2, 1, 32>}, {pipeline_mode = #tpu.pipeline_mode<synchronous>, transform_indices = @transform_9, window_bounds = array<i64: 2, 1, 32>}, {pipeline_mode = #tpu.pipeline_mode<synchronous>, transform_indices = @transform_10, window_bounds = array<i64: 2, 32, 64>}, {pipeline_mode = #tpu.pipeline_mode<synchronous>, transform_indices = @transform_11, window_bounds = array<i64: 2, 1, 64>}, {pipeline_mode = #tpu.pipeline_mode<synchronous>, transform_indices = @transform_12, window_bounds = array<i64: 2, 64, 32>}, {pipeline_mode = #tpu.pipeline_mode<synchronous>, transform_indices = @transform_13, window_bounds = array<i64: 2, 1, 32>}, {pipeline_mode = #tpu.pipeline_mode<synchronous>, transform_indices = @transform_14, window_bounds = array<i64: 2, 1, 32>}, {pipeline_mode = #tpu.pipeline_mode<synchronous>, transform_indices = @transform_15, window_bounds = array<i64: 2, 1, 32>}, {pipeline_mode = #tpu.pipeline_mode<synchronous>, transform_indices = @transform_16, window_bounds = array<i64: 32, 128>}, {pipeline_mode = #tpu.pipeline_mode<synchronous>, transform_indices = @transform_17, window_bounds = array<i64: 1, 128>}, {transform_indices = @transform_18, window_bounds = array<i64: 2, 1, 128>}, {transform_indices = @transform_19, window_bounds = array<i64: 2, 1, 128>}]} {
    %c0 = arith.constant 0 : index
    %c0_0 = arith.constant 0 : index
    %c0_1 = arith.constant 0 : index
    %0 = vector.load %arg1[%c0, %c0_0, %c0_1] : memref<2x8x32xf32, #tpu.memory_space<vmem>>, vector<2x8x32xf32>
    %1 = vector.shape_cast %0 : vector<2x8x32xf32> to vector<16x32xf32>
    %c0_2 = arith.constant 0 : index
    %c0_3 = arith.constant 0 : index
    %2 = vector.load %arg3[%c0_2, %c0_3] : memref<1x32xf32, #tpu.memory_space<vmem>>, vector<1x32xf32>
    %c0_4 = arith.constant 0 : index
    %c0_5 = arith.constant 0 : index
    %3 = vector.load %arg4[%c0_4, %c0_5] : memref<1x32xf32, #tpu.memory_space<vmem>>, vector<1x32xf32>
    %cst = arith.constant dense<0.000000e+00> : vector<16xf32>
    %4 = vector.multi_reduction <add>, %1, %cst [1] : vector<16x32xf32> to vector<16xf32>
    %5 = vector.shape_cast %4 : vector<16xf32> to vector<16x1xf32>
    %cst_6 = arith.constant 3.200000e+01 : f32
    %6 = vector.broadcast %cst_6 : f32 to vector<16x1xf32>
    %7 = arith.divf %5, %6 : vector<16x1xf32>
    %8 = vector.broadcast %7 : vector<16x1xf32> to vector<16x32xf32>
    %9 = arith.subf %1, %8 : vector<16x32xf32>
    %10 = arith.mulf %9, %9 : vector<16x32xf32>
    %cst_7 = arith.constant dense<0.000000e+00> : vector<16xf32>
    %11 = vector.multi_reduction <add>, %10, %cst_7 [1] : vector<16x32xf32> to vector<16xf32>
    %12 = vector.shape_cast %11 : vector<16xf32> to vector<16x1xf32>
    %cst_8 = arith.constant 3.200000e+01 : f32
    %13 = vector.broadcast %cst_8 : f32 to vector<16x1xf32>
    %14 = arith.divf %12, %13 : vector<16x1xf32>
    %cst_9 = arith.constant 9.99999996E-13 : f32
    %15 = vector.broadcast %cst_9 : f32 to vector<16x1xf32>
    %16 = arith.addf %14, %15 : vector<16x1xf32>
    %17 = math.rsqrt %16 : vector<16x1xf32>
    %18 = vector.broadcast %17 : vector<16x1xf32> to vector<16x32xf32>
    %19 = arith.mulf %9, %18 : vector<16x32xf32>
    %20 = vector.broadcast %2 : vector<1x32xf32> to vector<16x32xf32>
    %21 = arith.mulf %19, %20 : vector<16x32xf32>
    %22 = vector.broadcast %3 : vector<1x32xf32> to vector<16x32xf32>
    %23 = arith.addf %21, %22 : vector<16x32xf32>
    %c0_10 = arith.constant 0 : index
    %c0_11 = arith.constant 0 : index
    %c0_12 = arith.constant 0 : index
    %24 = vector.load %arg2[%c0_10, %c0_11, %c0_12] : memref<2x1x8xf32, #tpu.memory_space<vmem>>, vector<2x1x8xf32>
    %cst_13 = arith.constant 1.000000e+00 : f32
    %25 = vector.broadcast %cst_13 : f32 to vector<2x1x8xf32>
    %26 = arith.subf %25, %24 : vector<2x1x8xf32>
    %cst_14 = arith.constant -1.000000e+04 : f32
    %27 = vector.broadcast %cst_14 : f32 to vector<2x1x8xf32>
    %28 = arith.mulf %26, %27 : vector<2x1x8xf32>
    %29 = vector.extract_strided_slice %28 {offsets = [0, 0, 0], sizes = [1, 1, 8], strides = [1, 1, 1]} : vector<2x1x8xf32> to vector<1x1x8xf32>
    %30 = vector.shape_cast %29 : vector<1x1x8xf32> to vector<1x8xf32>
    %31 = vector.shape_cast %30 : vector<1x8xf32> to vector<1x8xf32>
    %32 = vector.broadcast %31 : vector<1x8xf32> to vector<8x8xf32>
    %33 = vector.extract_strided_slice %28 {offsets = [1, 0, 0], sizes = [1, 1, 8], strides = [1, 1, 1]} : vector<2x1x8xf32> to vector<1x1x8xf32>
    %34 = vector.shape_cast %33 : vector<1x1x8xf32> to vector<1x8xf32>
    %35 = vector.shape_cast %34 : vector<1x8xf32> to vector<1x8xf32>
    %36 = vector.broadcast %35 : vector<1x8xf32> to vector<8x8xf32>
    %37 = arith.truncf %23 : vector<16x32xf32> to vector<16x32xbf16>
    %c0_15 = arith.constant 0 : index
    %c0_16 = arith.constant 0 : index
    %c0_17 = arith.constant 0 : index
    %38 = vector.load %arg5[%c0_15, %c0_16, %c0_17] : memref<2x32x96xbf16, #tpu.memory_space<vmem>>, vector<1x32x96xbf16>
    %39 = vector.shape_cast %38 : vector<1x32x96xbf16> to vector<32x96xbf16>
    %cst_18 = arith.constant dense<0.000000e+00> : vector<16x96xf32>
    %40 = tpu.matmul %37, %39, %cst_18 {dimension_numbers = #tpu.dot_dimension_numbers<[1], [0], [0], [1], [0, 0, 1, 1], [], []>} : vector<16x32xbf16>, vector<32x96xbf16>, vector<16x96xf32> -> vector<16x96xf32>
    %c0_19 = arith.constant 0 : index
    %c0_20 = arith.constant 0 : index
    %c0_21 = arith.constant 0 : index
    %41 = vector.load %arg6[%c0_19, %c0_20, %c0_21] : memref<2x1x96xf32, #tpu.memory_space<vmem>>, vector<1x1x96xf32>
    %42 = vector.shape_cast %41 : vector<1x1x96xf32> to vector<1x96xf32>
    %43 = vector.broadcast %42 : vector<1x96xf32> to vector<16x96xf32>
    %44 = arith.addf %40, %43 : vector<16x96xf32>
    %45 = vector.extract_strided_slice %44 {offsets = [0, 0], sizes = [8, 16], strides = [1, 1]} : vector<16x96xf32> to vector<8x16xf32>
    %46 = arith.truncf %45 : vector<8x16xf32> to vector<8x16xbf16>
    %47 = vector.extract_strided_slice %44 {offsets = [0, 16], sizes = [8, 16], strides = [1, 1]} : vector<16x96xf32> to vector<8x16xf32>
    %48 = arith.truncf %47 : vector<8x16xf32> to vector<8x16xbf16>
    %49 = vector.extract_strided_slice %44 {offsets = [0, 32], sizes = [8, 16], strides = [1, 1]} : vector<16x96xf32> to vector<8x16xf32>
    %50 = arith.truncf %49 : vector<8x16xf32> to vector<8x16xbf16>
    %cst_22 = arith.constant dense<0.000000e+00> : vector<8x8xf32>
    %51 = tpu.matmul %46, %48, %cst_22 {dimension_numbers = #tpu.dot_dimension_numbers<[1], [1], [0], [0], [0, 0, 1, 0], [], []>} : vector<8x16xbf16>, vector<8x16xbf16>, vector<8x8xf32> -> vector<8x8xf32>
    %52 = arith.addf %51, %32 : vector<8x8xf32>
    %cst_23 = arith.constant dense<0xFF800000> : vector<8xf32>
    %53 = vector.multi_reduction <maximumf>, %52, %cst_23 [1] : vector<8x8xf32> to vector<8xf32>
    %54 = vector.shape_cast %53 : vector<8xf32> to vector<8x1xf32>
    %55 = vector.broadcast %54 : vector<8x1xf32> to vector<8x8xf32>
    %56 = arith.subf %52, %55 : vector<8x8xf32>
    %57 = math.exp %56 : vector<8x8xf32>
    %cst_24 = arith.constant dense<0.000000e+00> : vector<8xf32>
    %58 = vector.multi_reduction <add>, %57, %cst_24 [1] : vector<8x8xf32> to vector<8xf32>
    %59 = vector.shape_cast %58 : vector<8xf32> to vector<8x1xf32>
    %60 = tpu.reciprocal %59 {approx = true} : vector<8x1xf32> -> vector<8x1xf32>
    %61 = vector.broadcast %60 : vector<8x1xf32> to vector<8x8xf32>
    %62 = arith.mulf %57, %61 : vector<8x8xf32>
    %63 = arith.truncf %62 : vector<8x8xf32> to vector<8x8xbf16>
    %cst_25 = arith.constant dense<0.000000e+00> : vector<8x16xf32>
    %64 = tpu.matmul %63, %50, %cst_25 {dimension_numbers = #tpu.dot_dimension_numbers<[1], [0], [0], [1], [0, 0, 1, 1], [], []>} : vector<8x8xbf16>, vector<8x16xbf16>, vector<8x16xf32> -> vector<8x16xf32>
    %65 = vector.extract_strided_slice %44 {offsets = [0, 48], sizes = [8, 16], strides = [1, 1]} : vector<16x96xf32> to vector<8x16xf32>
    %66 = arith.truncf %65 : vector<8x16xf32> to vector<8x16xbf16>
    %67 = vector.extract_strided_slice %44 {offsets = [0, 64], sizes = [8, 16], strides = [1, 1]} : vector<16x96xf32> to vector<8x16xf32>
    %68 = arith.truncf %67 : vector<8x16xf32> to vector<8x16xbf16>
    %69 = vector.extract_strided_slice %44 {offsets = [0, 80], sizes = [8, 16], strides = [1, 1]} : vector<16x96xf32> to vector<8x16xf32>
    %70 = arith.truncf %69 : vector<8x16xf32> to vector<8x16xbf16>
    %cst_26 = arith.constant dense<0.000000e+00> : vector<8x8xf32>
    %71 = tpu.matmul %66, %68, %cst_26 {dimension_numbers = #tpu.dot_dimension_numbers<[1], [1], [0], [0], [0, 0, 1, 0], [], []>} : vector<8x16xbf16>, vector<8x16xbf16>, vector<8x8xf32> -> vector<8x8xf32>
    %72 = arith.addf %71, %32 : vector<8x8xf32>
    %cst_27 = arith.constant dense<0xFF800000> : vector<8xf32>
    %73 = vector.multi_reduction <maximumf>, %72, %cst_27 [1] : vector<8x8xf32> to vector<8xf32>
    %74 = vector.shape_cast %73 : vector<8xf32> to vector<8x1xf32>
    %75 = vector.broadcast %74 : vector<8x1xf32> to vector<8x8xf32>
    %76 = arith.subf %72, %75 : vector<8x8xf32>
    %77 = math.exp %76 : vector<8x8xf32>
    %cst_28 = arith.constant dense<0.000000e+00> : vector<8xf32>
    %78 = vector.multi_reduction <add>, %77, %cst_28 [1] : vector<8x8xf32> to vector<8xf32>
    %79 = vector.shape_cast %78 : vector<8xf32> to vector<8x1xf32>
    %80 = tpu.reciprocal %79 {approx = true} : vector<8x1xf32> -> vector<8x1xf32>
    %81 = vector.broadcast %80 : vector<8x1xf32> to vector<8x8xf32>
    %82 = arith.mulf %77, %81 : vector<8x8xf32>
    %83 = arith.truncf %82 : vector<8x8xf32> to vector<8x8xbf16>
    %cst_29 = arith.constant dense<0.000000e+00> : vector<8x16xf32>
    %84 = tpu.matmul %83, %70, %cst_29 {dimension_numbers = #tpu.dot_dimension_numbers<[1], [0], [0], [1], [0, 0, 1, 1], [], []>} : vector<8x8xbf16>, vector<8x16xbf16>, vector<8x16xf32> -> vector<8x16xf32>
    %85 = tpu.concatenate %64, %84 in 1 : vector<8x16xf32>, vector<8x16xf32> -> vector<8x32xf32>
    %86 = vector.extract_strided_slice %44 {offsets = [8, 0], sizes = [8, 16], strides = [1, 1]} : vector<16x96xf32> to vector<8x16xf32>
    %87 = arith.truncf %86 : vector<8x16xf32> to vector<8x16xbf16>
    %88 = vector.extract_strided_slice %44 {offsets = [8, 16], sizes = [8, 16], strides = [1, 1]} : vector<16x96xf32> to vector<8x16xf32>
    %89 = arith.truncf %88 : vector<8x16xf32> to vector<8x16xbf16>
    %90 = vector.extract_strided_slice %44 {offsets = [8, 32], sizes = [8, 16], strides = [1, 1]} : vector<16x96xf32> to vector<8x16xf32>
    %91 = arith.truncf %90 : vector<8x16xf32> to vector<8x16xbf16>
    %cst_30 = arith.constant dense<0.000000e+00> : vector<8x8xf32>
    %92 = tpu.matmul %87, %89, %cst_30 {dimension_numbers = #tpu.dot_dimension_numbers<[1], [1], [0], [0], [0, 0, 1, 0], [], []>} : vector<8x16xbf16>, vector<8x16xbf16>, vector<8x8xf32> -> vector<8x8xf32>
    %93 = arith.addf %92, %36 : vector<8x8xf32>
    %cst_31 = arith.constant dense<0xFF800000> : vector<8xf32>
    %94 = vector.multi_reduction <maximumf>, %93, %cst_31 [1] : vector<8x8xf32> to vector<8xf32>
    %95 = vector.shape_cast %94 : vector<8xf32> to vector<8x1xf32>
    %96 = vector.broadcast %95 : vector<8x1xf32> to vector<8x8xf32>
    %97 = arith.subf %93, %96 : vector<8x8xf32>
    %98 = math.exp %97 : vector<8x8xf32>
    %cst_32 = arith.constant dense<0.000000e+00> : vector<8xf32>
    %99 = vector.multi_reduction <add>, %98, %cst_32 [1] : vector<8x8xf32> to vector<8xf32>
    %100 = vector.shape_cast %99 : vector<8xf32> to vector<8x1xf32>
    %101 = tpu.reciprocal %100 {approx = true} : vector<8x1xf32> -> vector<8x1xf32>
    %102 = vector.broadcast %101 : vector<8x1xf32> to vector<8x8xf32>
    %103 = arith.mulf %98, %102 : vector<8x8xf32>
    %104 = arith.truncf %103 : vector<8x8xf32> to vector<8x8xbf16>
    %cst_33 = arith.constant dense<0.000000e+00> : vector<8x16xf32>
    %105 = tpu.matmul %104, %91, %cst_33 {dimension_numbers = #tpu.dot_dimension_numbers<[1], [0], [0], [1], [0, 0, 1, 1], [], []>} : vector<8x8xbf16>, vector<8x16xbf16>, vector<8x16xf32> -> vector<8x16xf32>
    %106 = vector.extract_strided_slice %44 {offsets = [8, 48], sizes = [8, 16], strides = [1, 1]} : vector<16x96xf32> to vector<8x16xf32>
    %107 = arith.truncf %106 : vector<8x16xf32> to vector<8x16xbf16>
    %108 = vector.extract_strided_slice %44 {offsets = [8, 64], sizes = [8, 16], strides = [1, 1]} : vector<16x96xf32> to vector<8x16xf32>
    %109 = arith.truncf %108 : vector<8x16xf32> to vector<8x16xbf16>
    %110 = vector.extract_strided_slice %44 {offsets = [8, 80], sizes = [8, 16], strides = [1, 1]} : vector<16x96xf32> to vector<8x16xf32>
    %111 = arith.truncf %110 : vector<8x16xf32> to vector<8x16xbf16>
    %cst_34 = arith.constant dense<0.000000e+00> : vector<8x8xf32>
    %112 = tpu.matmul %107, %109, %cst_34 {dimension_numbers = #tpu.dot_dimension_numbers<[1], [1], [0], [0], [0, 0, 1, 0], [], []>} : vector<8x16xbf16>, vector<8x16xbf16>, vector<8x8xf32> -> vector<8x8xf32>
    %113 = arith.addf %112, %36 : vector<8x8xf32>
    %cst_35 = arith.constant dense<0xFF800000> : vector<8xf32>
    %114 = vector.multi_reduction <maximumf>, %113, %cst_35 [1] : vector<8x8xf32> to vector<8xf32>
    %115 = vector.shape_cast %114 : vector<8xf32> to vector<8x1xf32>
    %116 = vector.broadcast %115 : vector<8x1xf32> to vector<8x8xf32>
    %117 = arith.subf %113, %116 : vector<8x8xf32>
    %118 = math.exp %117 : vector<8x8xf32>
    %cst_36 = arith.constant dense<0.000000e+00> : vector<8xf32>
    %119 = vector.multi_reduction <add>, %118, %cst_36 [1] : vector<8x8xf32> to vector<8xf32>
    %120 = vector.shape_cast %119 : vector<8xf32> to vector<8x1xf32>
    %121 = tpu.reciprocal %120 {approx = true} : vector<8x1xf32> -> vector<8x1xf32>
    %122 = vector.broadcast %121 : vector<8x1xf32> to vector<8x8xf32>
    %123 = arith.mulf %118, %122 : vector<8x8xf32>
    %124 = arith.truncf %123 : vector<8x8xf32> to vector<8x8xbf16>
    %cst_37 = arith.constant dense<0.000000e+00> : vector<8x16xf32>
    %125 = tpu.matmul %124, %111, %cst_37 {dimension_numbers = #tpu.dot_dimension_numbers<[1], [0], [0], [1], [0, 0, 1, 1], [], []>} : vector<8x8xbf16>, vector<8x16xbf16>, vector<8x16xf32> -> vector<8x16xf32>
    %126 = tpu.concatenate %105, %125 in 1 : vector<8x16xf32>, vector<8x16xf32> -> vector<8x32xf32>
    %127 = tpu.concatenate %85, %126 in 0 : vector<8x32xf32>, vector<8x32xf32> -> vector<16x32xf32>
    %128 = arith.truncf %127 : vector<16x32xf32> to vector<16x32xbf16>
    %c0_38 = arith.constant 0 : index
    %c0_39 = arith.constant 0 : index
    %c0_40 = arith.constant 0 : index
    %129 = vector.load %arg7[%c0_38, %c0_39, %c0_40] : memref<2x32x32xbf16, #tpu.memory_space<vmem>>, vector<1x32x32xbf16>
    %130 = vector.shape_cast %129 : vector<1x32x32xbf16> to vector<32x32xbf16>
    %cst_41 = arith.constant dense<0.000000e+00> : vector<16x32xf32>
    %131 = tpu.matmul %128, %130, %cst_41 {dimension_numbers = #tpu.dot_dimension_numbers<[1], [0], [0], [1], [0, 0, 1, 1], [], []>} : vector<16x32xbf16>, vector<32x32xbf16>, vector<16x32xf32> -> vector<16x32xf32>
    %c0_42 = arith.constant 0 : index
    %c0_43 = arith.constant 0 : index
    %c0_44 = arith.constant 0 : index
    %132 = vector.load %arg8[%c0_42, %c0_43, %c0_44] : memref<2x1x32xf32, #tpu.memory_space<vmem>>, vector<1x1x32xf32>
    %133 = vector.shape_cast %132 : vector<1x1x32xf32> to vector<1x32xf32>
    %134 = vector.broadcast %133 : vector<1x32xf32> to vector<16x32xf32>
    %135 = arith.addf %131, %134 : vector<16x32xf32>
    %136 = arith.addf %135, %23 : vector<16x32xf32>
    %c0_45 = arith.constant 0 : index
    %c0_46 = arith.constant 0 : index
    %c0_47 = arith.constant 0 : index
    %137 = vector.load %arg9[%c0_45, %c0_46, %c0_47] : memref<2x1x32xf32, #tpu.memory_space<vmem>>, vector<1x1x32xf32>
    %138 = vector.shape_cast %137 : vector<1x1x32xf32> to vector<1x32xf32>
    %c0_48 = arith.constant 0 : index
    %c0_49 = arith.constant 0 : index
    %c0_50 = arith.constant 0 : index
    %139 = vector.load %arg10[%c0_48, %c0_49, %c0_50] : memref<2x1x32xf32, #tpu.memory_space<vmem>>, vector<1x1x32xf32>
    %140 = vector.shape_cast %139 : vector<1x1x32xf32> to vector<1x32xf32>
    %cst_51 = arith.constant dense<0.000000e+00> : vector<16xf32>
    %141 = vector.multi_reduction <add>, %136, %cst_51 [1] : vector<16x32xf32> to vector<16xf32>
    %142 = vector.shape_cast %141 : vector<16xf32> to vector<16x1xf32>
    %cst_52 = arith.constant 3.200000e+01 : f32
    %143 = vector.broadcast %cst_52 : f32 to vector<16x1xf32>
    %144 = arith.divf %142, %143 : vector<16x1xf32>
    %145 = vector.broadcast %144 : vector<16x1xf32> to vector<16x32xf32>
    %146 = arith.subf %136, %145 : vector<16x32xf32>
    %147 = arith.mulf %146, %146 : vector<16x32xf32>
    %cst_53 = arith.constant dense<0.000000e+00> : vector<16xf32>
    %148 = vector.multi_reduction <add>, %147, %cst_53 [1] : vector<16x32xf32> to vector<16xf32>
    %149 = vector.shape_cast %148 : vector<16xf32> to vector<16x1xf32>
    %cst_54 = arith.constant 3.200000e+01 : f32
    %150 = vector.broadcast %cst_54 : f32 to vector<16x1xf32>
    %151 = arith.divf %149, %150 : vector<16x1xf32>
    %cst_55 = arith.constant 9.99999996E-13 : f32
    %152 = vector.broadcast %cst_55 : f32 to vector<16x1xf32>
    %153 = arith.addf %151, %152 : vector<16x1xf32>
    %154 = math.rsqrt %153 : vector<16x1xf32>
    %155 = vector.broadcast %154 : vector<16x1xf32> to vector<16x32xf32>
    %156 = arith.mulf %146, %155 : vector<16x32xf32>
    %157 = vector.broadcast %138 : vector<1x32xf32> to vector<16x32xf32>
    %158 = arith.mulf %156, %157 : vector<16x32xf32>
    %159 = vector.broadcast %140 : vector<1x32xf32> to vector<16x32xf32>
    %160 = arith.addf %158, %159 : vector<16x32xf32>
    %161 = arith.truncf %160 : vector<16x32xf32> to vector<16x32xbf16>
    %c0_56 = arith.constant 0 : index
    %c0_57 = arith.constant 0 : index
    %c0_58 = arith.constant 0 : index
    %162 = vector.load %arg11[%c0_56, %c0_57, %c0_58] : memref<2x32x64xbf16, #tpu.memory_space<vmem>>, vector<1x32x64xbf16>
    %163 = vector.shape_cast %162 : vector<1x32x64xbf16> to vector<32x64xbf16>
    %cst_59 = arith.constant dense<0.000000e+00> : vector<16x64xf32>
    %164 = tpu.matmul %161, %163, %cst_59 {dimension_numbers = #tpu.dot_dimension_numbers<[1], [0], [0], [1], [0, 0, 1, 1], [], []>} : vector<16x32xbf16>, vector<32x64xbf16>, vector<16x64xf32> -> vector<16x64xf32>
    %c0_60 = arith.constant 0 : index
    %c0_61 = arith.constant 0 : index
    %c0_62 = arith.constant 0 : index
    %165 = vector.load %arg12[%c0_60, %c0_61, %c0_62] : memref<2x1x64xf32, #tpu.memory_space<vmem>>, vector<1x1x64xf32>
    %166 = vector.shape_cast %165 : vector<1x1x64xf32> to vector<1x64xf32>
    %167 = vector.broadcast %166 : vector<1x64xf32> to vector<16x64xf32>
    %168 = arith.addf %164, %167 : vector<16x64xf32>
    %169 = arith.mulf %168, %168 : vector<16x64xf32>
    %170 = arith.mulf %168, %169 : vector<16x64xf32>
    %cst_63 = arith.constant 4.471500e-02 : f32
    %171 = vector.broadcast %cst_63 : f32 to vector<16x64xf32>
    %172 = arith.mulf %171, %170 : vector<16x64xf32>
    %173 = arith.addf %168, %172 : vector<16x64xf32>
    %cst_64 = arith.constant 0.797884583 : f32
    %174 = vector.broadcast %cst_64 : f32 to vector<16x64xf32>
    %175 = arith.mulf %174, %173 : vector<16x64xf32>
    %176 = math.tanh %175 : vector<16x64xf32>
    %cst_65 = arith.constant 1.000000e+00 : f32
    %177 = vector.broadcast %cst_65 : f32 to vector<16x64xf32>
    %178 = arith.addf %177, %176 : vector<16x64xf32>
    %cst_66 = arith.constant 5.000000e-01 : f32
    %179 = vector.broadcast %cst_66 : f32 to vector<16x64xf32>
    %180 = arith.mulf %179, %178 : vector<16x64xf32>
    %181 = arith.mulf %168, %180 : vector<16x64xf32>
    %182 = arith.truncf %181 : vector<16x64xf32> to vector<16x64xbf16>
    %c0_67 = arith.constant 0 : index
    %c0_68 = arith.constant 0 : index
    %c0_69 = arith.constant 0 : index
    %183 = vector.load %arg13[%c0_67, %c0_68, %c0_69] : memref<2x64x32xbf16, #tpu.memory_space<vmem>>, vector<1x64x32xbf16>
    %184 = vector.shape_cast %183 : vector<1x64x32xbf16> to vector<64x32xbf16>
    %cst_70 = arith.constant dense<0.000000e+00> : vector<16x32xf32>
    %185 = tpu.matmul %182, %184, %cst_70 {dimension_numbers = #tpu.dot_dimension_numbers<[1], [0], [0], [1], [0, 0, 1, 1], [], []>} : vector<16x64xbf16>, vector<64x32xbf16>, vector<16x32xf32> -> vector<16x32xf32>
    %c0_71 = arith.constant 0 : index
    %c0_72 = arith.constant 0 : index
    %c0_73 = arith.constant 0 : index
    %186 = vector.load %arg14[%c0_71, %c0_72, %c0_73] : memref<2x1x32xf32, #tpu.memory_space<vmem>>, vector<1x1x32xf32>
    %187 = vector.shape_cast %186 : vector<1x1x32xf32> to vector<1x32xf32>
    %188 = vector.broadcast %187 : vector<1x32xf32> to vector<16x32xf32>
    %189 = arith.addf %185, %188 : vector<16x32xf32>
    %190 = arith.addf %189, %160 : vector<16x32xf32>
    %c0_74 = arith.constant 0 : index
    %c0_75 = arith.constant 0 : index
    %c0_76 = arith.constant 0 : index
    %191 = vector.load %arg15[%c0_74, %c0_75, %c0_76] : memref<2x1x32xf32, #tpu.memory_space<vmem>>, vector<1x1x32xf32>
    %192 = vector.shape_cast %191 : vector<1x1x32xf32> to vector<1x32xf32>
    %c0_77 = arith.constant 0 : index
    %c0_78 = arith.constant 0 : index
    %c0_79 = arith.constant 0 : index
    %193 = vector.load %arg16[%c0_77, %c0_78, %c0_79] : memref<2x1x32xf32, #tpu.memory_space<vmem>>, vector<1x1x32xf32>
    %194 = vector.shape_cast %193 : vector<1x1x32xf32> to vector<1x32xf32>
    %cst_80 = arith.constant dense<0.000000e+00> : vector<16xf32>
    %195 = vector.multi_reduction <add>, %190, %cst_80 [1] : vector<16x32xf32> to vector<16xf32>
    %196 = vector.shape_cast %195 : vector<16xf32> to vector<16x1xf32>
    %cst_81 = arith.constant 3.200000e+01 : f32
    %197 = vector.broadcast %cst_81 : f32 to vector<16x1xf32>
    %198 = arith.divf %196, %197 : vector<16x1xf32>
    %199 = vector.broadcast %198 : vector<16x1xf32> to vector<16x32xf32>
    %200 = arith.subf %190, %199 : vector<16x32xf32>
    %201 = arith.mulf %200, %200 : vector<16x32xf32>
    %cst_82 = arith.constant dense<0.000000e+00> : vector<16xf32>
    %202 = vector.multi_reduction <add>, %201, %cst_82 [1] : vector<16x32xf32> to vector<16xf32>
    %203 = vector.shape_cast %202 : vector<16xf32> to vector<16x1xf32>
    %cst_83 = arith.constant 3.200000e+01 : f32
    %204 = vector.broadcast %cst_83 : f32 to vector<16x1xf32>
    %205 = arith.divf %203, %204 : vector<16x1xf32>
    %cst_84 = arith.constant 9.99999996E-13 : f32
    %206 = vector.broadcast %cst_84 : f32 to vector<16x1xf32>
    %207 = arith.addf %205, %206 : vector<16x1xf32>
    %208 = math.rsqrt %207 : vector<16x1xf32>
    %209 = vector.broadcast %208 : vector<16x1xf32> to vector<16x32xf32>
    %210 = arith.mulf %200, %209 : vector<16x32xf32>
    %211 = vector.broadcast %192 : vector<1x32xf32> to vector<16x32xf32>
    %212 = arith.mulf %210, %211 : vector<16x32xf32>
    %213 = vector.broadcast %194 : vector<1x32xf32> to vector<16x32xf32>
    %214 = arith.addf %212, %213 : vector<16x32xf32>
    %215 = arith.truncf %214 : vector<16x32xf32> to vector<16x32xbf16>
    %c1 = arith.constant 1 : index
    %c0_85 = arith.constant 0 : index
    %c0_86 = arith.constant 0 : index
    %216 = vector.load %arg5[%c1, %c0_85, %c0_86] : memref<2x32x96xbf16, #tpu.memory_space<vmem>>, vector<1x32x96xbf16>
    %217 = vector.shape_cast %216 : vector<1x32x96xbf16> to vector<32x96xbf16>
    %cst_87 = arith.constant dense<0.000000e+00> : vector<16x96xf32>
    %218 = tpu.matmul %215, %217, %cst_87 {dimension_numbers = #tpu.dot_dimension_numbers<[1], [0], [0], [1], [0, 0, 1, 1], [], []>} : vector<16x32xbf16>, vector<32x96xbf16>, vector<16x96xf32> -> vector<16x96xf32>
    %c1_88 = arith.constant 1 : index
    %c0_89 = arith.constant 0 : index
    %c0_90 = arith.constant 0 : index
    %219 = vector.load %arg6[%c1_88, %c0_89, %c0_90] : memref<2x1x96xf32, #tpu.memory_space<vmem>>, vector<1x1x96xf32>
    %220 = vector.shape_cast %219 : vector<1x1x96xf32> to vector<1x96xf32>
    %221 = vector.broadcast %220 : vector<1x96xf32> to vector<16x96xf32>
    %222 = arith.addf %218, %221 : vector<16x96xf32>
    %223 = vector.extract_strided_slice %222 {offsets = [0, 0], sizes = [8, 16], strides = [1, 1]} : vector<16x96xf32> to vector<8x16xf32>
    %224 = arith.truncf %223 : vector<8x16xf32> to vector<8x16xbf16>
    %225 = vector.extract_strided_slice %222 {offsets = [0, 16], sizes = [8, 16], strides = [1, 1]} : vector<16x96xf32> to vector<8x16xf32>
    %226 = arith.truncf %225 : vector<8x16xf32> to vector<8x16xbf16>
    %227 = vector.extract_strided_slice %222 {offsets = [0, 32], sizes = [8, 16], strides = [1, 1]} : vector<16x96xf32> to vector<8x16xf32>
    %228 = arith.truncf %227 : vector<8x16xf32> to vector<8x16xbf16>
    %cst_91 = arith.constant dense<0.000000e+00> : vector<8x8xf32>
    %229 = tpu.matmul %224, %226, %cst_91 {dimension_numbers = #tpu.dot_dimension_numbers<[1], [1], [0], [0], [0, 0, 1, 0], [], []>} : vector<8x16xbf16>, vector<8x16xbf16>, vector<8x8xf32> -> vector<8x8xf32>
    %230 = arith.addf %229, %32 : vector<8x8xf32>
    %cst_92 = arith.constant dense<0xFF800000> : vector<8xf32>
    %231 = vector.multi_reduction <maximumf>, %230, %cst_92 [1] : vector<8x8xf32> to vector<8xf32>
    %232 = vector.shape_cast %231 : vector<8xf32> to vector<8x1xf32>
    %233 = vector.broadcast %232 : vector<8x1xf32> to vector<8x8xf32>
    %234 = arith.subf %230, %233 : vector<8x8xf32>
    %235 = math.exp %234 : vector<8x8xf32>
    %cst_93 = arith.constant dense<0.000000e+00> : vector<8xf32>
    %236 = vector.multi_reduction <add>, %235, %cst_93 [1] : vector<8x8xf32> to vector<8xf32>
    %237 = vector.shape_cast %236 : vector<8xf32> to vector<8x1xf32>
    %238 = tpu.reciprocal %237 {approx = true} : vector<8x1xf32> -> vector<8x1xf32>
    %239 = vector.broadcast %238 : vector<8x1xf32> to vector<8x8xf32>
    %240 = arith.mulf %235, %239 : vector<8x8xf32>
    %241 = arith.truncf %240 : vector<8x8xf32> to vector<8x8xbf16>
    %cst_94 = arith.constant dense<0.000000e+00> : vector<8x16xf32>
    %242 = tpu.matmul %241, %228, %cst_94 {dimension_numbers = #tpu.dot_dimension_numbers<[1], [0], [0], [1], [0, 0, 1, 1], [], []>} : vector<8x8xbf16>, vector<8x16xbf16>, vector<8x16xf32> -> vector<8x16xf32>
    %243 = vector.extract_strided_slice %222 {offsets = [0, 48], sizes = [8, 16], strides = [1, 1]} : vector<16x96xf32> to vector<8x16xf32>
    %244 = arith.truncf %243 : vector<8x16xf32> to vector<8x16xbf16>
    %245 = vector.extract_strided_slice %222 {offsets = [0, 64], sizes = [8, 16], strides = [1, 1]} : vector<16x96xf32> to vector<8x16xf32>
    %246 = arith.truncf %245 : vector<8x16xf32> to vector<8x16xbf16>
    %247 = vector.extract_strided_slice %222 {offsets = [0, 80], sizes = [8, 16], strides = [1, 1]} : vector<16x96xf32> to vector<8x16xf32>
    %248 = arith.truncf %247 : vector<8x16xf32> to vector<8x16xbf16>
    %cst_95 = arith.constant dense<0.000000e+00> : vector<8x8xf32>
    %249 = tpu.matmul %244, %246, %cst_95 {dimension_numbers = #tpu.dot_dimension_numbers<[1], [1], [0], [0], [0, 0, 1, 0], [], []>} : vector<8x16xbf16>, vector<8x16xbf16>, vector<8x8xf32> -> vector<8x8xf32>
    %250 = arith.addf %249, %32 : vector<8x8xf32>
    %cst_96 = arith.constant dense<0xFF800000> : vector<8xf32>
    %251 = vector.multi_reduction <maximumf>, %250, %cst_96 [1] : vector<8x8xf32> to vector<8xf32>
    %252 = vector.shape_cast %251 : vector<8xf32> to vector<8x1xf32>
    %253 = vector.broadcast %252 : vector<8x1xf32> to vector<8x8xf32>
    %254 = arith.subf %250, %253 : vector<8x8xf32>
    %255 = math.exp %254 : vector<8x8xf32>
    %cst_97 = arith.constant dense<0.000000e+00> : vector<8xf32>
    %256 = vector.multi_reduction <add>, %255, %cst_97 [1] : vector<8x8xf32> to vector<8xf32>
    %257 = vector.shape_cast %256 : vector<8xf32> to vector<8x1xf32>
    %258 = tpu.reciprocal %257 {approx = true} : vector<8x1xf32> -> vector<8x1xf32>
    %259 = vector.broadcast %258 : vector<8x1xf32> to vector<8x8xf32>
    %260 = arith.mulf %255, %259 : vector<8x8xf32>
    %261 = arith.truncf %260 : vector<8x8xf32> to vector<8x8xbf16>
    %cst_98 = arith.constant dense<0.000000e+00> : vector<8x16xf32>
    %262 = tpu.matmul %261, %248, %cst_98 {dimension_numbers = #tpu.dot_dimension_numbers<[1], [0], [0], [1], [0, 0, 1, 1], [], []>} : vector<8x8xbf16>, vector<8x16xbf16>, vector<8x16xf32> -> vector<8x16xf32>
    %263 = tpu.concatenate %242, %262 in 1 : vector<8x16xf32>, vector<8x16xf32> -> vector<8x32xf32>
    %264 = vector.extract_strided_slice %222 {offsets = [8, 0], sizes = [8, 16], strides = [1, 1]} : vector<16x96xf32> to vector<8x16xf32>
    %265 = arith.truncf %264 : vector<8x16xf32> to vector<8x16xbf16>
    %266 = vector.extract_strided_slice %222 {offsets = [8, 16], sizes = [8, 16], strides = [1, 1]} : vector<16x96xf32> to vector<8x16xf32>
    %267 = arith.truncf %266 : vector<8x16xf32> to vector<8x16xbf16>
    %268 = vector.extract_strided_slice %222 {offsets = [8, 32], sizes = [8, 16], strides = [1, 1]} : vector<16x96xf32> to vector<8x16xf32>
    %269 = arith.truncf %268 : vector<8x16xf32> to vector<8x16xbf16>
    %cst_99 = arith.constant dense<0.000000e+00> : vector<8x8xf32>
    %270 = tpu.matmul %265, %267, %cst_99 {dimension_numbers = #tpu.dot_dimension_numbers<[1], [1], [0], [0], [0, 0, 1, 0], [], []>} : vector<8x16xbf16>, vector<8x16xbf16>, vector<8x8xf32> -> vector<8x8xf32>
    %271 = arith.addf %270, %36 : vector<8x8xf32>
    %cst_100 = arith.constant dense<0xFF800000> : vector<8xf32>
    %272 = vector.multi_reduction <maximumf>, %271, %cst_100 [1] : vector<8x8xf32> to vector<8xf32>
    %273 = vector.shape_cast %272 : vector<8xf32> to vector<8x1xf32>
    %274 = vector.broadcast %273 : vector<8x1xf32> to vector<8x8xf32>
    %275 = arith.subf %271, %274 : vector<8x8xf32>
    %276 = math.exp %275 : vector<8x8xf32>
    %cst_101 = arith.constant dense<0.000000e+00> : vector<8xf32>
    %277 = vector.multi_reduction <add>, %276, %cst_101 [1] : vector<8x8xf32> to vector<8xf32>
    %278 = vector.shape_cast %277 : vector<8xf32> to vector<8x1xf32>
    %279 = tpu.reciprocal %278 {approx = true} : vector<8x1xf32> -> vector<8x1xf32>
    %280 = vector.broadcast %279 : vector<8x1xf32> to vector<8x8xf32>
    %281 = arith.mulf %276, %280 : vector<8x8xf32>
    %282 = arith.truncf %281 : vector<8x8xf32> to vector<8x8xbf16>
    %cst_102 = arith.constant dense<0.000000e+00> : vector<8x16xf32>
    %283 = tpu.matmul %282, %269, %cst_102 {dimension_numbers = #tpu.dot_dimension_numbers<[1], [0], [0], [1], [0, 0, 1, 1], [], []>} : vector<8x8xbf16>, vector<8x16xbf16>, vector<8x16xf32> -> vector<8x16xf32>
    %284 = vector.extract_strided_slice %222 {offsets = [8, 48], sizes = [8, 16], strides = [1, 1]} : vector<16x96xf32> to vector<8x16xf32>
    %285 = arith.truncf %284 : vector<8x16xf32> to vector<8x16xbf16>
    %286 = vector.extract_strided_slice %222 {offsets = [8, 64], sizes = [8, 16], strides = [1, 1]} : vector<16x96xf32> to vector<8x16xf32>
    %287 = arith.truncf %286 : vector<8x16xf32> to vector<8x16xbf16>
    %288 = vector.extract_strided_slice %222 {offsets = [8, 80], sizes = [8, 16], strides = [1, 1]} : vector<16x96xf32> to vector<8x16xf32>
    %289 = arith.truncf %288 : vector<8x16xf32> to vector<8x16xbf16>
    %cst_103 = arith.constant dense<0.000000e+00> : vector<8x8xf32>
    %290 = tpu.matmul %285, %287, %cst_103 {dimension_numbers = #tpu.dot_dimension_numbers<[1], [1], [0], [0], [0, 0, 1, 0], [], []>} : vector<8x16xbf16>, vector<8x16xbf16>, vector<8x8xf32> -> vector<8x8xf32>
    %291 = arith.addf %290, %36 : vector<8x8xf32>
    %cst_104 = arith.constant dense<0xFF800000> : vector<8xf32>
    %292 = vector.multi_reduction <maximumf>, %291, %cst_104 [1] : vector<8x8xf32> to vector<8xf32>
    %293 = vector.shape_cast %292 : vector<8xf32> to vector<8x1xf32>
    %294 = vector.broadcast %293 : vector<8x1xf32> to vector<8x8xf32>
    %295 = arith.subf %291, %294 : vector<8x8xf32>
    %296 = math.exp %295 : vector<8x8xf32>
    %cst_105 = arith.constant dense<0.000000e+00> : vector<8xf32>
    %297 = vector.multi_reduction <add>, %296, %cst_105 [1] : vector<8x8xf32> to vector<8xf32>
    %298 = vector.shape_cast %297 : vector<8xf32> to vector<8x1xf32>
    %299 = tpu.reciprocal %298 {approx = true} : vector<8x1xf32> -> vector<8x1xf32>
    %300 = vector.broadcast %299 : vector<8x1xf32> to vector<8x8xf32>
    %301 = arith.mulf %296, %300 : vector<8x8xf32>
    %302 = arith.truncf %301 : vector<8x8xf32> to vector<8x8xbf16>
    %cst_106 = arith.constant dense<0.000000e+00> : vector<8x16xf32>
    %303 = tpu.matmul %302, %289, %cst_106 {dimension_numbers = #tpu.dot_dimension_numbers<[1], [0], [0], [1], [0, 0, 1, 1], [], []>} : vector<8x8xbf16>, vector<8x16xbf16>, vector<8x16xf32> -> vector<8x16xf32>
    %304 = tpu.concatenate %283, %303 in 1 : vector<8x16xf32>, vector<8x16xf32> -> vector<8x32xf32>
    %305 = tpu.concatenate %263, %304 in 0 : vector<8x32xf32>, vector<8x32xf32> -> vector<16x32xf32>
    %306 = arith.truncf %305 : vector<16x32xf32> to vector<16x32xbf16>
    %c1_107 = arith.constant 1 : index
    %c0_108 = arith.constant 0 : index
    %c0_109 = arith.constant 0 : index
    %307 = vector.load %arg7[%c1_107, %c0_108, %c0_109] : memref<2x32x32xbf16, #tpu.memory_space<vmem>>, vector<1x32x32xbf16>
    %308 = vector.shape_cast %307 : vector<1x32x32xbf16> to vector<32x32xbf16>
    %cst_110 = arith.constant dense<0.000000e+00> : vector<16x32xf32>
    %309 = tpu.matmul %306, %308, %cst_110 {dimension_numbers = #tpu.dot_dimension_numbers<[1], [0], [0], [1], [0, 0, 1, 1], [], []>} : vector<16x32xbf16>, vector<32x32xbf16>, vector<16x32xf32> -> vector<16x32xf32>
    %c1_111 = arith.constant 1 : index
    %c0_112 = arith.constant 0 : index
    %c0_113 = arith.constant 0 : index
    %310 = vector.load %arg8[%c1_111, %c0_112, %c0_113] : memref<2x1x32xf32, #tpu.memory_space<vmem>>, vector<1x1x32xf32>
    %311 = vector.shape_cast %310 : vector<1x1x32xf32> to vector<1x32xf32>
    %312 = vector.broadcast %311 : vector<1x32xf32> to vector<16x32xf32>
    %313 = arith.addf %309, %312 : vector<16x32xf32>
    %314 = arith.addf %313, %214 : vector<16x32xf32>
    %c1_114 = arith.constant 1 : index
    %c0_115 = arith.constant 0 : index
    %c0_116 = arith.constant 0 : index
    %315 = vector.load %arg9[%c1_114, %c0_115, %c0_116] : memref<2x1x32xf32, #tpu.memory_space<vmem>>, vector<1x1x32xf32>
    %316 = vector.shape_cast %315 : vector<1x1x32xf32> to vector<1x32xf32>
    %c1_117 = arith.constant 1 : index
    %c0_118 = arith.constant 0 : index
    %c0_119 = arith.constant 0 : index
    %317 = vector.load %arg10[%c1_117, %c0_118, %c0_119] : memref<2x1x32xf32, #tpu.memory_space<vmem>>, vector<1x1x32xf32>
    %318 = vector.shape_cast %317 : vector<1x1x32xf32> to vector<1x32xf32>
    %cst_120 = arith.constant dense<0.000000e+00> : vector<16xf32>
    %319 = vector.multi_reduction <add>, %314, %cst_120 [1] : vector<16x32xf32> to vector<16xf32>
    %320 = vector.shape_cast %319 : vector<16xf32> to vector<16x1xf32>
    %cst_121 = arith.constant 3.200000e+01 : f32
    %321 = vector.broadcast %cst_121 : f32 to vector<16x1xf32>
    %322 = arith.divf %320, %321 : vector<16x1xf32>
    %323 = vector.broadcast %322 : vector<16x1xf32> to vector<16x32xf32>
    %324 = arith.subf %314, %323 : vector<16x32xf32>
    %325 = arith.mulf %324, %324 : vector<16x32xf32>
    %cst_122 = arith.constant dense<0.000000e+00> : vector<16xf32>
    %326 = vector.multi_reduction <add>, %325, %cst_122 [1] : vector<16x32xf32> to vector<16xf32>
    %327 = vector.shape_cast %326 : vector<16xf32> to vector<16x1xf32>
    %cst_123 = arith.constant 3.200000e+01 : f32
    %328 = vector.broadcast %cst_123 : f32 to vector<16x1xf32>
    %329 = arith.divf %327, %328 : vector<16x1xf32>
    %cst_124 = arith.constant 9.99999996E-13 : f32
    %330 = vector.broadcast %cst_124 : f32 to vector<16x1xf32>
    %331 = arith.addf %329, %330 : vector<16x1xf32>
    %332 = math.rsqrt %331 : vector<16x1xf32>
    %333 = vector.broadcast %332 : vector<16x1xf32> to vector<16x32xf32>
    %334 = arith.mulf %324, %333 : vector<16x32xf32>
    %335 = vector.broadcast %316 : vector<1x32xf32> to vector<16x32xf32>
    %336 = arith.mulf %334, %335 : vector<16x32xf32>
    %337 = vector.broadcast %318 : vector<1x32xf32> to vector<16x32xf32>
    %338 = arith.addf %336, %337 : vector<16x32xf32>
    %339 = arith.truncf %338 : vector<16x32xf32> to vector<16x32xbf16>
    %c1_125 = arith.constant 1 : index
    %c0_126 = arith.constant 0 : index
    %c0_127 = arith.constant 0 : index
    %340 = vector.load %arg11[%c1_125, %c0_126, %c0_127] : memref<2x32x64xbf16, #tpu.memory_space<vmem>>, vector<1x32x64xbf16>
    %341 = vector.shape_cast %340 : vector<1x32x64xbf16> to vector<32x64xbf16>
    %cst_128 = arith.constant dense<0.000000e+00> : vector<16x64xf32>
    %342 = tpu.matmul %339, %341, %cst_128 {dimension_numbers = #tpu.dot_dimension_numbers<[1], [0], [0], [1], [0, 0, 1, 1], [], []>} : vector<16x32xbf16>, vector<32x64xbf16>, vector<16x64xf32> -> vector<16x64xf32>
    %c1_129 = arith.constant 1 : index
    %c0_130 = arith.constant 0 : index
    %c0_131 = arith.constant 0 : index
    %343 = vector.load %arg12[%c1_129, %c0_130, %c0_131] : memref<2x1x64xf32, #tpu.memory_space<vmem>>, vector<1x1x64xf32>
    %344 = vector.shape_cast %343 : vector<1x1x64xf32> to vector<1x64xf32>
    %345 = vector.broadcast %344 : vector<1x64xf32> to vector<16x64xf32>
    %346 = arith.addf %342, %345 : vector<16x64xf32>
    %347 = arith.mulf %346, %346 : vector<16x64xf32>
    %348 = arith.mulf %346, %347 : vector<16x64xf32>
    %cst_132 = arith.constant 4.471500e-02 : f32
    %349 = vector.broadcast %cst_132 : f32 to vector<16x64xf32>
    %350 = arith.mulf %349, %348 : vector<16x64xf32>
    %351 = arith.addf %346, %350 : vector<16x64xf32>
    %cst_133 = arith.constant 0.797884583 : f32
    %352 = vector.broadcast %cst_133 : f32 to vector<16x64xf32>
    %353 = arith.mulf %352, %351 : vector<16x64xf32>
    %354 = math.tanh %353 : vector<16x64xf32>
    %cst_134 = arith.constant 1.000000e+00 : f32
    %355 = vector.broadcast %cst_134 : f32 to vector<16x64xf32>
    %356 = arith.addf %355, %354 : vector<16x64xf32>
    %cst_135 = arith.constant 5.000000e-01 : f32
    %357 = vector.broadcast %cst_135 : f32 to vector<16x64xf32>
    %358 = arith.mulf %357, %356 : vector<16x64xf32>
    %359 = arith.mulf %346, %358 : vector<16x64xf32>
    %360 = arith.truncf %359 : vector<16x64xf32> to vector<16x64xbf16>
    %c1_136 = arith.constant 1 : index
    %c0_137 = arith.constant 0 : index
    %c0_138 = arith.constant 0 : index
    %361 = vector.load %arg13[%c1_136, %c0_137, %c0_138] : memref<2x64x32xbf16, #tpu.memory_space<vmem>>, vector<1x64x32xbf16>
    %362 = vector.shape_cast %361 : vector<1x64x32xbf16> to vector<64x32xbf16>
    %cst_139 = arith.constant dense<0.000000e+00> : vector<16x32xf32>
    %363 = tpu.matmul %360, %362, %cst_139 {dimension_numbers = #tpu.dot_dimension_numbers<[1], [0], [0], [1], [0, 0, 1, 1], [], []>} : vector<16x64xbf16>, vector<64x32xbf16>, vector<16x32xf32> -> vector<16x32xf32>
    %c1_140 = arith.constant 1 : index
    %c0_141 = arith.constant 0 : index
    %c0_142 = arith.constant 0 : index
    %364 = vector.load %arg14[%c1_140, %c0_141, %c0_142] : memref<2x1x32xf32, #tpu.memory_space<vmem>>, vector<1x1x32xf32>
    %365 = vector.shape_cast %364 : vector<1x1x32xf32> to vector<1x32xf32>
    %366 = vector.broadcast %365 : vector<1x32xf32> to vector<16x32xf32>
    %367 = arith.addf %363, %366 : vector<16x32xf32>
    %368 = arith.addf %367, %338 : vector<16x32xf32>
    %c1_143 = arith.constant 1 : index
    %c0_144 = arith.constant 0 : index
    %c0_145 = arith.constant 0 : index
    %369 = vector.load %arg15[%c1_143, %c0_144, %c0_145] : memref<2x1x32xf32, #tpu.memory_space<vmem>>, vector<1x1x32xf32>
    %370 = vector.shape_cast %369 : vector<1x1x32xf32> to vector<1x32xf32>
    %c1_146 = arith.constant 1 : index
    %c0_147 = arith.constant 0 : index
    %c0_148 = arith.constant 0 : index
    %371 = vector.load %arg16[%c1_146, %c0_147, %c0_148] : memref<2x1x32xf32, #tpu.memory_space<vmem>>, vector<1x1x32xf32>
    %372 = vector.shape_cast %371 : vector<1x1x32xf32> to vector<1x32xf32>
    %cst_149 = arith.constant dense<0.000000e+00> : vector<16xf32>
    %373 = vector.multi_reduction <add>, %368, %cst_149 [1] : vector<16x32xf32> to vector<16xf32>
    %374 = vector.shape_cast %373 : vector<16xf32> to vector<16x1xf32>
    %cst_150 = arith.constant 3.200000e+01 : f32
    %375 = vector.broadcast %cst_150 : f32 to vector<16x1xf32>
    %376 = arith.divf %374, %375 : vector<16x1xf32>
    %377 = vector.broadcast %376 : vector<16x1xf32> to vector<16x32xf32>
    %378 = arith.subf %368, %377 : vector<16x32xf32>
    %379 = arith.mulf %378, %378 : vector<16x32xf32>
    %cst_151 = arith.constant dense<0.000000e+00> : vector<16xf32>
    %380 = vector.multi_reduction <add>, %379, %cst_151 [1] : vector<16x32xf32> to vector<16xf32>
    %381 = vector.shape_cast %380 : vector<16xf32> to vector<16x1xf32>
    %cst_152 = arith.constant 3.200000e+01 : f32
    %382 = vector.broadcast %cst_152 : f32 to vector<16x1xf32>
    %383 = arith.divf %381, %382 : vector<16x1xf32>
    %cst_153 = arith.constant 9.99999996E-13 : f32
    %384 = vector.broadcast %cst_153 : f32 to vector<16x1xf32>
    %385 = arith.addf %383, %384 : vector<16x1xf32>
    %386 = math.rsqrt %385 : vector<16x1xf32>
    %387 = vector.broadcast %386 : vector<16x1xf32> to vector<16x32xf32>
    %388 = arith.mulf %378, %387 : vector<16x32xf32>
    %389 = vector.broadcast %370 : vector<1x32xf32> to vector<16x32xf32>
    %390 = arith.mulf %388, %389 : vector<16x32xf32>
    %391 = vector.broadcast %372 : vector<1x32xf32> to vector<16x32xf32>
    %392 = arith.addf %390, %391 : vector<16x32xf32>
    %393 = vector.extract_strided_slice %392 {offsets = [0, 0], sizes = [1, 32], strides = [1, 1]} : vector<16x32xf32> to vector<1x32xf32>
    %394 = vector.extract_strided_slice %392 {offsets = [8, 0], sizes = [1, 32], strides = [1, 1]} : vector<16x32xf32> to vector<1x32xf32>
    %395 = tpu.concatenate %393, %394 in 0 : vector<1x32xf32>, vector<1x32xf32> -> vector<2x32xf32>
    %396 = arith.truncf %395 : vector<2x32xf32> to vector<2x32xbf16>
    %c0_154 = arith.constant 0 : index
    %c0_155 = arith.constant 0 : index
    %397 = vector.load %arg17[%c0_154, %c0_155] : memref<32x128xbf16, #tpu.memory_space<vmem>>, vector<32x128xbf16>
    %cst_156 = arith.constant dense<0.000000e+00> : vector<2x128xf32>
    %398 = tpu.matmul %396, %397, %cst_156 {dimension_numbers = #tpu.dot_dimension_numbers<[1], [0], [0], [1], [0, 0, 1, 1], [], []>} : vector<2x32xbf16>, vector<32x128xbf16>, vector<2x128xf32> -> vector<2x128xf32>
    %c0_157 = arith.constant 0 : index
    %c0_158 = arith.constant 0 : index
    %399 = vector.load %arg18[%c0_157, %c0_158] : memref<1x128xf32, #tpu.memory_space<vmem>>, vector<1x128xf32>
    %400 = vector.broadcast %399 : vector<1x128xf32> to vector<2x128xf32>
    %401 = arith.addf %398, %400 : vector<2x128xf32>
    %cst_159 = arith.constant 0.000000e+00 : f32
    %402 = vector.broadcast %cst_159 : f32 to vector<2x96xf32>
    %403 = tpu.concatenate %395, %402 in 1 : vector<2x32xf32>, vector<2x96xf32> -> vector<2x128xf32>
    %404 = vector.shape_cast %401 : vector<2x128xf32> to vector<2x1x128xf32>
    %c0_160 = arith.constant 0 : index
    %c0_161 = arith.constant 0 : index
    %c0_162 = arith.constant 0 : index
    %405 = vector.load %arg19[%c0_160, %c0_161, %c0_162] : memref<2x1x128xf32, #tpu.memory_space<vmem>>, vector<2x1x128xf32>
    tpu.vector_store %arg19[%c0_160, %c0_161, %c0_162], %404 {strides = array<i32>} : memref<2x1x128xf32, #tpu.memory_space<vmem>>, vector<2x1x128xf32>,
    %406 = vector.shape_cast %403 : vector<2x128xf32> to vector<2x1x128xf32>
    %c0_163 = arith.constant 0 : index
    %c0_164 = arith.constant 0 : index
    %c0_165 = arith.constant 0 : index
    %407 = vector.load %arg20[%c0_163, %c0_164, %c0_165] : memref<2x1x128xf32, #tpu.memory_space<vmem>>, vector<2x1x128xf32>
    tpu.vector_store %arg20[%c0_163, %c0_164, %c0_165], %406 {strides = array<i32>} : memref<2x1x128xf32, #tpu.memory_space<vmem>>, vector<2x1x128xf32>,
    return
  }
  func.func @transform_0(%arg0: i32) -> (i32, i32, i32) {
    %c0_i32 = arith.constant 0 : i32
    %c0_i32_0 = arith.constant 0 : i32
    %c0_i32_1 = arith.constant 0 : i32
    return %arg0, %c0_i32, %c0_i32_0 : i32, i32, i32
  }
  func.func @transform_1(%arg0: i32) -> (i32, i32, i32) {
    %c0_i32 = arith.constant 0 : i32
    %c0_i32_0 = arith.constant 0 : i32
    %c0_i32_1 = arith.constant 0 : i32
    return %arg0, %c0_i32, %c0_i32_0 : i32, i32, i32
  }
  func.func @transform_2(%arg0: i32) -> (i32, i32) {
    %c0_i32 = arith.constant 0 : i32
    %c0_i32_0 = arith.constant 0 : i32
    %c0_i32_1 = arith.constant 0 : i32
    return %c0_i32, %c0_i32_0 : i32, i32
  }
  func.func @transform_3(%arg0: i32) -> (i32, i32) {
    %c0_i32 = arith.constant 0 : i32
    %c0_i32_0 = arith.constant 0 : i32
    %c0_i32_1 = arith.constant 0 : i32
    return %c0_i32, %c0_i32_0 : i32, i32
  }
  func.func @transform_4(%arg0: i32) -> (i32, i32, i32) {
    %c0_i32 = arith.constant 0 : i32
    %c0_i32_0 = arith.constant 0 : i32
    %c0_i32_1 = arith.constant 0 : i32
    %c0_i32_2 = arith.constant 0 : i32
    return %c0_i32, %c0_i32_0, %c0_i32_1 : i32, i32, i32
  }
  func.func @transform_5(%arg0: i32) -> (i32, i32, i32) {
    %c0_i32 = arith.constant 0 : i32
    %c0_i32_0 = arith.constant 0 : i32
    %c0_i32_1 = arith.constant 0 : i32
    %c0_i32_2 = arith.constant 0 : i32
    return %c0_i32, %c0_i32_0, %c0_i32_1 : i32, i32, i32
  }
  func.func @transform_6(%arg0: i32) -> (i32, i32, i32) {
    %c0_i32 = arith.constant 0 : i32
    %c0_i32_0 = arith.constant 0 : i32
    %c0_i32_1 = arith.constant 0 : i32
    %c0_i32_2 = arith.constant 0 : i32
    return %c0_i32, %c0_i32_0, %c0_i32_1 : i32, i32, i32
  }
  func.func @transform_7(%arg0: i32) -> (i32, i32, i32) {
    %c0_i32 = arith.constant 0 : i32
    %c0_i32_0 = arith.constant 0 : i32
    %c0_i32_1 = arith.constant 0 : i32
    %c0_i32_2 = arith.constant 0 : i32
    return %c0_i32, %c0_i32_0, %c0_i32_1 : i32, i32, i32
  }
  func.func @transform_8(%arg0: i32) -> (i32, i32, i32) {
    %c0_i32 = arith.constant 0 : i32
    %c0_i32_0 = arith.constant 0 : i32
    %c0_i32_1 = arith.constant 0 : i32
    %c0_i32_2 = arith.constant 0 : i32
    return %c0_i32, %c0_i32_0, %c0_i32_1 : i32, i32, i32
  }
  func.func @transform_9(%arg0: i32) -> (i32, i32, i32) {
    %c0_i32 = arith.constant 0 : i32
    %c0_i32_0 = arith.constant 0 : i32
    %c0_i32_1 = arith.constant 0 : i32
    %c0_i32_2 = arith.constant 0 : i32
    return %c0_i32, %c0_i32_0, %c0_i32_1 : i32, i32, i32
  }
  func.func @transform_10(%arg0: i32) -> (i32, i32, i32) {
    %c0_i32 = arith.constant 0 : i32
    %c0_i32_0 = arith.constant 0 : i32
    %c0_i32_1 = arith.constant 0 : i32
    %c0_i32_2 = arith.constant 0 : i32
    return %c0_i32, %c0_i32_0, %c0_i32_1 : i32, i32, i32
  }
  func.func @transform_11(%arg0: i32) -> (i32, i32, i32) {
    %c0_i32 = arith.constant 0 : i32
    %c0_i32_0 = arith.constant 0 : i32
    %c0_i32_1 = arith.constant 0 : i32
    %c0_i32_2 = arith.constant 0 : i32
    return %c0_i32, %c0_i32_0, %c0_i32_1 : i32, i32, i32
  }
  func.func @transform_12(%arg0: i32) -> (i32, i32, i32) {
    %c0_i32 = arith.constant 0 : i32
    %c0_i32_0 = arith.constant 0 : i32
    %c0_i32_1 = arith.constant 0 : i32
    %c0_i32_2 = arith.constant 0 : i32
    return %c0_i32, %c0_i32_0, %c0_i32_1 : i32, i32, i32
  }
  func.func @transform_13(%arg0: i32) -> (i32, i32, i32) {
    %c0_i32 = arith.constant 0 : i32
    %c0_i32_0 = arith.constant 0 : i32
    %c0_i32_1 = arith.constant 0 : i32
    %c0_i32_2 = arith.constant 0 : i32
    return %c0_i32, %c0_i32_0, %c0_i32_1 : i32, i32, i32
  }
  func.func @transform_14(%arg0: i32) -> (i32, i32, i32) {
    %c0_i32 = arith.constant 0 : i32
    %c0_i32_0 = arith.constant 0 : i32
    %c0_i32_1 = arith.constant 0 : i32
    %c0_i32_2 = arith.constant 0 : i32
    return %c0_i32, %c0_i32_0, %c0_i32_1 : i32, i32, i32
  }
  func.func @transform_15(%arg0: i32) -> (i32, i32, i32) {
    %c0_i32 = arith.constant 0 : i32
    %c0_i32_0 = arith.constant 0 : i32
    %c0_i32_1 = arith.constant 0 : i32
    %c0_i32_2 = arith.constant 0 : i32
    return %c0_i32, %c0_i32_0, %c0_i32_1 : i32, i32, i32
  }
  func.func @transform_16(%arg0: i32) -> (i32, i32) {
    %c0_i32 = arith.constant 0 : i32
    %c0_i32_0 = arith.constant 0 : i32
    %c0_i32_1 = arith.constant 0 : i32
    return %c0_i32, %c0_i32_0 : i32, i32
  }
  func.func @transform_17(%arg0: i32) -> (i32, i32) {
    %c0_i32 = arith.constant 0 : i32
    %c0_i32_0 = arith.constant 0 : i32
    %c0_i32_1 = arith.constant 0 : i32
    return %c0_i32, %c0_i32_0 : i32, i32
  }
  func.func @transform_18(%arg0: i32) -> (i32, i32, i32) {
    %c0_i32 = arith.constant 0 : i32
    %c0_i32_0 = arith.constant 0 : i32
    %c0_i32_1 = arith.constant 0 : i32
    return %arg0, %c0_i32, %c0_i32_0 : i32, i32, i32
  }
  func.func @transform_19(%arg0: i32) -> (i32, i32, i32) {
    %c0_i32 = arith.constant 0 : i32
    %c0_i32_0 = arith.constant 0 : i32
    %c0_i32_1 = arith.constant 0 : i32
    return %arg0, %c0_i32, %c0_i32_0 : i32, i32, i32
  }
}

</mosaic_0001>

<llo_original>
// kernel: sentiment_bert_forward.1
$region0: #{sentiment_bert_forward.1}
  #allocation0 [shape = 'u32[]', space=smem, size = 0x4, offset = 0x4, fixed_abs, tag = 'smem constant byte address 0x4 - core index']
  #allocation1 [shape = 'u32[144,128]{1,0:T(1,128)}', space=vmem, size = 0x12000, scoped, tag = 'internal scratch']
  %s0 = inlined_call_operand.vmem [shape: f32[2,8,32], index: 0, kind: input, shape index: {}]
  %s1 = inlined_call_operand.vmem [shape: f32[2,1,8], index: 1, kind: input, shape index: {}]
  %s2 = inlined_call_operand.vmem [shape: f32[1,32], index: 2, kind: input, shape index: {}]
  %s3 = inlined_call_operand.vmem [shape: f32[1,32], index: 3, kind: input, shape index: {}]
  %s4 = inlined_call_operand.vmem [shape: bf16[2,32,96], index: 4, kind: input, shape index: {}]
  %s5 = inlined_call_operand.vmem [shape: f32[2,1,96], index: 5, kind: input, shape index: {}]
  %s6 = inlined_call_operand.vmem [shape: bf16[2,32,32], index: 6, kind: input, shape index: {}]
  %s7 = inlined_call_operand.vmem [shape: f32[2,1,32], index: 7, kind: input, shape index: {}]
  %s8 = inlined_call_operand.vmem [shape: f32[2,1,32], index: 8, kind: input, shape index: {}]
  %s9 = inlined_call_operand.vmem [shape: f32[2,1,32], index: 9, kind: input, shape index: {}]
  %s10 = inlined_call_operand.vmem [shape: bf16[2,32,64], index: 10, kind: input, shape index: {}]
  %s11 = inlined_call_operand.vmem [shape: f32[2,1,64], index: 11, kind: input, shape index: {}]
  %s12 = inlined_call_operand.vmem [shape: bf16[2,64,32], index: 12, kind: input, shape index: {}]
  %s13 = inlined_call_operand.vmem [shape: f32[2,1,32], index: 13, kind: input, shape index: {}]
  %s14 = inlined_call_operand.vmem [shape: f32[2,1,32], index: 14, kind: input, shape index: {}]
  %s15 = inlined_call_operand.vmem [shape: f32[2,1,32], index: 15, kind: input, shape index: {}]
  %s16 = inlined_call_operand.vmem [shape: bf16[32,128], index: 16, kind: input, shape index: {}]
  %s17 = inlined_call_operand.vmem [shape: f32[1,128], index: 17, kind: input, shape index: {}]
  %s18 = inlined_call_operand.hbm [shape: f32[2,1,128], index: 18, kind: output, shape index: {0}]
  %s19 = inlined_call_operand.hbm [shape: f32[2,1,128], index: 19, kind: output, shape index: {1}]
  %20 = xla_tuple %s18, %s19
  %s21 = sld [smem:[#allocation0]]
  $region90: #{sentiment_bert_forward.1} parent=0
    _
  %s23 = ssub.s32 1, %s21
  %s24 = scalar_select 0, %s23, %s21
  $region1: #{sentiment_bert_forward.1} parent=0
    #allocation2 [shape = 'u8[1024]{0}', space=vmem, size = 0x400, scoped, tag = 'output window, operand 0, single buffered']
    #allocation3 [shape = 's32[1]{0}', space=sflag, size = 0x4, scoped, tag = 'scoped memory for sentiment_bert_forward.1']
    #allocation4 [shape = 'u8[1024]{0}', space=vmem, size = 0x400, scoped, tag = 'output window, operand 1, single buffered']
    #allocation5 [shape = 's32[1]{0}', space=sflag, size = 0x4, scoped, tag = 'scoped memory for sentiment_bert_forward.1']
    %25 = vsyncpa [#allocation3], 0
    %26 = vsyncpa [#allocation5], 0
    // Predicated region
    $region2: #{sentiment_bert_forward.1} parent=1 // pred_check
      _
    $region3: #{sentiment_bert_forward.1} parent=1 // pred_check_branch
      %28 = sbr.rel (0) target = $region5
    $region4: #{sentiment_bert_forward.1} parent=1 // pred_region
      _
    $region5: #{sentiment_bert_forward.1} parent=1 // pred_fallthru
      _
    // Predicated region
    $region6: #{sentiment_bert_forward.1} parent=1 // pred_check
      _
    $region7: #{sentiment_bert_forward.1} parent=1 // pred_check_branch
      %30 = sbr.rel (0) target = $region9
    $region8: #{sentiment_bert_forward.1} parent=1 // pred_region
      _
    $region9: #{sentiment_bert_forward.1} parent=1 // pred_fallthru
      _
    // Predicated region
    $region10: #{sentiment_bert_forward.1} parent=1 // pred_check
      _
    $region11: #{sentiment_bert_forward.1} parent=1 // pred_check_branch
      %32 = sbr.rel (0) target = $region13
    $region12: #{sentiment_bert_forward.1} parent=1 // pred_region
      _
    $region13: #{sentiment_bert_forward.1} parent=1 // pred_fallthru
      _
    // Predicated region
    $region14: #{sentiment_bert_forward.1} parent=1 // pred_check
      _
    $region15: #{sentiment_bert_forward.1} parent=1 // pred_check_branch
      %34 = sbr.rel (0) target = $region17
    $region16: #{sentiment_bert_forward.1} parent=1 // pred_region
      _
    $region17: #{sentiment_bert_forward.1} parent=1 // pred_fallthru
      _
    // Predicated region
    $region18: #{sentiment_bert_forward.1} parent=1 // pred_check
      _
    $region19: #{sentiment_bert_forward.1} parent=1 // pred_check_branch
      %36 = sbr.rel (0) target = $region21
    $region20: #{sentiment_bert_forward.1} parent=1 // pred_region
      _
    $region21: #{sentiment_bert_forward.1} parent=1 // pred_fallthru
      _
    // Predicated region
    $region22: #{sentiment_bert_forward.1} parent=1 // pred_check
      _
    $region23: #{sentiment_bert_forward.1} parent=1 // pred_check_branch
      %38 = sbr.rel (0) target = $region25
    $region24: #{sentiment_bert_forward.1} parent=1 // pred_region
      _
    $region25: #{sentiment_bert_forward.1} parent=1 // pred_fallthru
      _
    // Predicated region
    $region26: #{sentiment_bert_forward.1} parent=1 // pred_check
      _
    $region27: #{sentiment_bert_forward.1} parent=1 // pred_check_branch
      %40 = sbr.rel (0) target = $region29
    $region28: #{sentiment_bert_forward.1} parent=1 // pred_region
      _
    $region29: #{sentiment_bert_forward.1} parent=1 // pred_fallthru
      _
    // Predicated region
    $region30: #{sentiment_bert_forward.1} parent=1 // pred_check
      _
    $region31: #{sentiment_bert_forward.1} parent=1 // pred_check_branch
      %42 = sbr.rel (0) target = $region33
    $region32: #{sentiment_bert_forward.1} parent=1 // pred_region
      _
    $region33: #{sentiment_bert_forward.1} parent=1 // pred_fallthru
      _
    // Predicated region
    $region34: #{sentiment_bert_forward.1} parent=1 // pred_check
      _
    $region35: #{sentiment_bert_forward.1} parent=1 // pred_check_branch
      %44 = sbr.rel (0) target = $region37
    $region36: #{sentiment_bert_forward.1} parent=1 // pred_region
      _
    $region37: #{sentiment_bert_forward.1} parent=1 // pred_fallthru
      _
    // Predicated region
    $region38: #{sentiment_bert_forward.1} parent=1 // pred_check
      _
    $region39: #{sentiment_bert_forward.1} parent=1 // pred_check_branch
      %46 = sbr.rel (0) target = $region41
    $region40: #{sentiment_bert_forward.1} parent=1 // pred_region
      _
    $region41: #{sentiment_bert_forward.1} parent=1 // pred_fallthru
      _
    // Predicated region
    $region42: #{sentiment_bert_forward.1} parent=1 // pred_check
      _
    $region43: #{sentiment_bert_forward.1} parent=1 // pred_check_branch
      %48 = sbr.rel (0) target = $region45
    $region44: #{sentiment_bert_forward.1} parent=1 // pred_region
      _
    $region45: #{sentiment_bert_forward.1} parent=1 // pred_fallthru
      _
    // Predicated region
    $region46: #{sentiment_bert_forward.1} parent=1 // pred_check
      _
    $region47: #{sentiment_bert_forward.1} parent=1 // pred_check_branch
      %50 = sbr.rel (0) target = $region49
    $region48: #{sentiment_bert_forward.1} parent=1 // pred_region
      _
    $region49: #{sentiment_bert_forward.1} parent=1 // pred_fallthru
      _
    // Predicated region
    $region50: #{sentiment_bert_forward.1} parent=1 // pred_check
      _
    $region51: #{sentiment_bert_forward.1} parent=1 // pred_check_branch
      %52 = sbr.rel (0) target = $region53
    $region52: #{sentiment_bert_forward.1} parent=1 // pred_region
      _
    $region53: #{sentiment_bert_forward.1} parent=1 // pred_fallthru
      _
    // Predicated region
    $region54: #{sentiment_bert_forward.1} parent=1 // pred_check
      _
    $region55: #{sentiment_bert_forward.1} parent=1 // pred_check_branch
      %54 = sbr.rel (0) target = $region57
    $region56: #{sentiment_bert_forward.1} parent=1 // pred_region
      _
    $region57: #{sentiment_bert_forward.1} parent=1 // pred_fallthru
      _
    // Predicated region
    $region58: #{sentiment_bert_forward.1} parent=1 // pred_check
      _
    $region59: #{sentiment_bert_forward.1} parent=1 // pred_check_branch
      %56 = sbr.rel (0) target = $region61
    $region60: #{sentiment_bert_forward.1} parent=1 // pred_region
      _
    $region61: #{sentiment_bert_forward.1} parent=1 // pred_fallthru
      _
    // Predicated region
    $region62: #{sentiment_bert_forward.1} parent=1 // pred_check
      _
    $region63: #{sentiment_bert_forward.1} parent=1 // pred_check_branch
      %58 = sbr.rel (0) target = $region65
    $region64: #{sentiment_bert_forward.1} parent=1 // pred_region
      _
    $region65: #{sentiment_bert_forward.1} parent=1 // pred_fallthru
      _
    // Predicated region
    $region66: #{sentiment_bert_forward.1} parent=1 // pred_check
      _
    $region67: #{sentiment_bert_forward.1} parent=1 // pred_check_branch
      %60 = sbr.rel (0) target = $region69
    $region68: #{sentiment_bert_forward.1} parent=1 // pred_region
      _
    $region69: #{sentiment_bert_forward.1} parent=1 // pred_fallthru
      _
    // Predicated region
    $region70: #{sentiment_bert_forward.1} parent=1 // pred_check
      _
    $region71: #{sentiment_bert_forward.1} parent=1 // pred_check_branch
      %62 = sbr.rel (0) target = $region73
    $region72: #{sentiment_bert_forward.1} parent=1 // pred_region
      _
    $region73: #{sentiment_bert_forward.1} parent=1 // pred_fallthru
      _
    %v64 = vld [vmem:[%s0] sm:$0xff]
    %v65 = vld [vmem:[%s0 + $0x8] sm:$0xff]
    %v66 = vld [vmem:[%s2] sm:$0x1]
    %v67 = vld [vmem:[%s3] sm:$0x1]
    %vm68 = vcmask 261120
    %v69 = vsel %vm68, %v64, 0.0
    %70 = vadd.xlane.f32.xlu0 %v69
    %v71 = vpop.xlane.xlu0 %70
    %v72 = vsel %vm68, %v65, 0.0
    %73 = vadd.xlane.f32.xlu0 %v72
    %v74 = vpop.xlane.xlu0 %73
    %v75 = vrcp.pop 32.0
    %v76 = vmul.f32 %v71, %v75
    %v77 = vmul.f32 %v74, %v75
    %v78 = vsub.f32 %v64, %v76
    %v79 = vsub.f32 %v65, %v77
    %v80 = vmul.f32 %v78, %v78
    %v81 = vmul.f32 %v79, %v79
    %v82 = vsel %vm68, %v80, 0.0
    %83 = vadd.xlane.f32.xlu0 %v82
    %v84 = vpop.xlane.xlu0 %83
    %v85 = vsel %vm68, %v81, 0.0
    %86 = vadd.xlane.f32.xlu0 %v85
    %v87 = vpop.xlane.xlu0 %86
    %v88 = vmul.f32 %v84, %v75
    %v89 = vmul.f32 %v87, %v75
    %v90 = vadd.f32 %v88, 1e-12
    %v91 = vadd.f32 %v89, 1e-12
    %v92 = vrsqrt.pop %v90
    %v93 = vrsqrt.pop %v91
    %v94 = vmul.f32 %v78, %v92
    %v95 = vmul.f32 %v79, %v93
    %v97 = vlaneseq
    %v98 = vshrl.u32 %v97, 7
    %v99 = vsub.s32 0, %v98
    %v100 = vrot.slane %v66, %v99
    %v102 = vmul.f32 %v94, %v100
    %v103 = vmul.f32 %v95, %v100
    %v105 = vlaneseq
    %v106 = vshrl.u32 %v105, 7
    %v107 = vsub.s32 0, %v106
    %v108 = vrot.slane %v67, %v107
    %v110 = vadd.f32 %v102, %v108
    %v111 = vadd.f32 %v103, %v108
    %v112 = vld [vmem:[%s1] sm:$0x1]
    %v113 = vld [vmem:[%s1 + $0x1] sm:$0x1]
    %v114 = vsub.f32 1.0, %v112
    %v115 = vsub.f32 1.0, %v113
    %v116 = vmul.f32 %v114, -10000.0
    %v117 = vmul.f32 %v115, -10000.0
    %v119 = vlaneseq
    %v120 = vshrl.u32 %v119, 7
    %v121 = vsub.s32 0, %v120
    %v122 = vrot.slane %v116, %v121
    %v125 = vlaneseq
    %v126 = vshrl.u32 %v125, 7
    %v127 = vsub.s32 0, %v126
    %v128 = vrot.slane %v117, %v127
    %v130 = vpack.c.bf16 %v111, %v110
    %v131 = vld [vmem:[%s4] sm:$0xf]
    %v132 = vld [vmem:[%s4 + $0x4] sm:$0xf]
    %v133 = vld [vmem:[%s4 + $0x8] sm:$0xf]
    %v134 = vld [vmem:[%s4 + $0xc] sm:$0xf]
    %v135 = vld [vmem:[%s5] sm:$0x1]
    %v137 = vlaneseq
    %v138 = vshrl.u32 %v137, 7
    %v139 = vsub.s32 0, %v138
    %v140 = vrot.slane %v135, %v139
    %v146 = vunpack.c.l.b16 %v131
    %v147 = vunpack.c.l.b16 %v132
    %v148 = vunpack.c.l.b16 %v133
    %v149 = vunpack.c.l.b16 %v134
    %v150 = vpack.c.b16 %v147, %v146
    %v151 = vpack.c.b16 %v149, %v148
    %v155 = vsel %vm68, %v130, 0
    %157 = vmatprep.subr.bf16.mxu0 0
    %158 = vmatpush1.bf16.msra.mxu0 0
    %159 = vmatprep.subr.bf16.mxu0 0
    %160 = vmatpush1.bf16.msra.mxu0 0
    %161 = vmatprep.subr.bf16.mxu0 0
    %162 = vmatpush1.bf16.msra.mxu0 0
    %163 = vmatprep.subr.bf16.mxu0 0
    %164 = vmatpush1.bf16.msra.mxu0 0
    %165 = vmatprep.subr.bf16.mxu0 0
    %166 = vmatpush1.bf16.msra.mxu0 0
    %167 = vmatprep.subr.bf16.mxu0 0
    %168 = vmatpush1.bf16.msra.mxu0 0
    %169 = vmatprep.subr.bf16.mxu0 0
    %170 = vmatpush1.bf16.msra.mxu0 %v151
    %171 = vmatprep.subr.bf16.mxu0 0
    %172 = vmatpush1.bf16.msra.mxu0 %v150
    %173 = vmatprep.subr.bf16.mxu0 0
    %174 = vmatpush2.bf16.msra.mxu0 0
    %175 = vmatprep.subr.bf16.mxu0 0
    %176 = vmatpush2.bf16.msra.mxu0 0
    %177 = vmatprep.subr.bf16.mxu0 0
    %178 = vmatpush2.bf16.msra.mxu0 0
    %179 = vmatprep.subr.bf16.mxu0 0
    %180 = vmatpush2.bf16.msra.mxu0 0
    %181 = vmatprep.subr.bf16.mxu0 0
    %182 = vmatpush2.bf16.msra.mxu0 0
    %183 = vmatprep.subr.bf16.mxu0 0
    %184 = vmatpush2.bf16.msra.mxu0 0
    %185 = vmatprep.subr.bf16.mxu0 0
    %186 = vmatpush2.bf16.msra.mxu0 0
    %187 = vmatprep.subr.bf16.mxu0 0
    %188 = vmatpush2.bf16.msra.mxu0 0
    %189 = vmatprep.mubr.bf16.mxu0 0
    %190 = vmatmul.mubr.bf16.gmra.mxu0 %v155
    %v191 = vpop.f32.mrf.mxu0
    %v192 = vadd.f32 %v140, %v191
    %v193 = vpop.f32.mrf.mxu0
    %v194 = vpop.f32.mrf.mxu0
    %v195 = vadd.f32 %v140, %v194
    %v196 = vpop.f32.mrf.mxu0
    %197 = vdwg.mxu0
    %v198 = vpack.c.bf16 %v192, %v192
    %200 = vrot.lane.b32.xlu0 %v198, 112
    %v201 = vpop.permute.xlu0 %200
    %vm202 = vcmask 130048
    %v204 = vsel %vm202, %v198, 0
    %v207 = vsel %vm202, %v201, 0
    %209 = vmatprep.subr.bf16.mxu0 0
    %210 = vmatpush1.bf16.xpose.msra.mxu0 0
    %211 = vmatprep.subr.bf16.mxu0 0
    %212 = vmatpush1.bf16.xpose.msra.mxu0 0
    %213 = vmatprep.subr.bf16.mxu0 0
    %214 = vmatpush1.bf16.xpose.msra.mxu0 0
    %215 = vmatprep.subr.bf16.mxu0 0
    %216 = vmatpush1.bf16.xpose.msra.mxu0 0
    %217 = vmatprep.subr.bf16.mxu0 0
    %218 = vmatpush1.bf16.xpose.msra.mxu0 0
    %219 = vmatprep.subr.bf16.mxu0 0
    %220 = vmatpush1.bf16.xpose.msra.mxu0 0
    %221 = vmatprep.subr.bf16.mxu0 0
    %222 = vmatpush1.bf16.xpose.msra.mxu0 0
    %223 = vmatprep.subr.bf16.mxu0 0
    %224 = vmatpush1.bf16.xpose.msra.mxu0 %v207
    %225 = vmatprep.subr.bf16.mxu0 0
    %226 = vmatpush2.bf16.xpose.msra.mxu0 0
    %227 = vmatprep.subr.bf16.mxu0 0
    %228 = vmatpush2.bf16.xpose.msra.mxu0 0
    %229 = vmatprep.subr.bf16.mxu0 0
    %230 = vmatpush2.bf16.xpose.msra.mxu0 0
    %231 = vmatprep.subr.bf16.mxu0 0
    %232 = vmatpush2.bf16.xpose.msra.mxu0 0
    %233 = vmatprep.subr.bf16.mxu0 0
    %234 = vmatpush2.bf16.xpose.msra.mxu0 0
    %235 = vmatprep.subr.bf16.mxu0 0
    %236 = vmatpush2.bf16.xpose.msra.mxu0 0
    %237 = vmatprep.subr.bf16.mxu0 0
    %238 = vmatpush2.bf16.xpose.msra.mxu0 0
    %239 = vmatprep.subr.bf16.mxu0 0
    %240 = vmatpush2.bf16.xpose.msra.mxu0 0
    %241 = vmatprep.mubr.bf16.mxu0 0
    %242 = vmatmul.mubr.bf16.gmra.mxu0 %v204
    %v243 = vpop.f32.mrf.mxu0
    %v244 = vadd.f32 %v122, %v243
    %v245 = vpop.f32.mrf.mxu0
    %v246 = vpop.f32.mrf.mxu0
    %v247 = vpop.f32.mrf.mxu0
    %248 = vdwg.mxu0
    %vm249 = vcmask 64512
    %v250 = vsel %vm249, %v244, -inf
    %251 = vmax.xlane.f32.xlu0 %v250
    %v252 = vpop.xlane.xlu0 %251
    %v253 = vsub.f32 %v244, %v252
    %v254 = vmul.f32 %v253, 1.442695
    %v255 = vpow.pop %v254
    %v256 = vsel %vm249, %v255, 0.0
    %257 = vadd.xlane.f32.xlu0 %v256
    %v258 = vpop.xlane.xlu0 %257
    %v259 = vrcp.pop %v258
    %v260 = vmul.f32 %v255, %v259
    %v261 = vpack.c.bf16 %v260, %v260
    %262 = vrot.lane.b32.xlu0 %v198, 96
    %v263 = vpop.permute.xlu0 %262
    %v265 = vsel %vm249, %v261, 0
    %vm267 = vcmask 1043456
    %v269 = vsel %vm267, %v263, 0
    %271 = vmatprep.subr.bf16.mxu0 0
    %272 = vmatpush1.bf16.msra.mxu0 0
    %273 = vmatprep.subr.bf16.mxu0 0
    %274 = vmatpush1.bf16.msra.mxu0 0
    %275 = vmatprep.subr.bf16.mxu0 0
    %276 = vmatpush1.bf16.msra.mxu0 0
    %277 = vmatprep.subr.bf16.mxu0 0
    %278 = vmatpush1.bf16.msra.mxu0 0
    %279 = vmatprep.subr.bf16.mxu0 0
    %280 = vmatpush1.bf16.msra.mxu0 0
    %281 = vmatprep.subr.bf16.mxu0 0
    %282 = vmatpush1.bf16.msra.mxu0 0
    %283 = vmatprep.subr.bf16.mxu0 0
    %284 = vmatpush1.bf16.msra.mxu0 0
    %285 = vmatprep.subr.bf16.mxu0 0
    %286 = vmatpush1.bf16.msra.mxu0 %v269
    %287 = vmatprep.subr.bf16.mxu0 0
    %288 = vmatpush2.bf16.msra.mxu0 0
    %289 = vmatprep.subr.bf16.mxu0 0
    %290 = vmatpush2.bf16.msra.mxu0 0
    %291 = vmatprep.subr.bf16.mxu0 0
    %292 = vmatpush2.bf16.msra.mxu0 0
    %293 = vmatprep.subr.bf16.mxu0 0
    %294 = vmatpush2.bf16.msra.mxu0 0
    %295 = vmatprep.subr.bf16.mxu0 0
    %296 = vmatpush2.bf16.msra.mxu0 0
    %297 = vmatprep.subr.bf16.mxu0 0
    %298 = vmatpush2.bf16.msra.mxu0 0
    %299 = vmatprep.subr.bf16.mxu0 0
    %300 = vmatpush2.bf16.msra.mxu0 0
    %301 = vmatprep.subr.bf16.mxu0 0
    %302 = vmatpush2.bf16.msra.mxu0 0
    %303 = vmatprep.mubr.bf16.mxu0 0
    %304 = vmatmul.mubr.bf16.gmra.mxu0 %v265
    %v305 = vpop.f32.mrf.mxu0
    %v306 = vadd.f32 0.0, %v305
    %v307 = vpop.f32.mrf.mxu0
    %v308 = vpop.f32.mrf.mxu0
    %v309 = vpop.f32.mrf.mxu0
    %310 = vdwg.mxu0
    %311 = vrot.lane.b32.xlu0 %v198, 80
    %v312 = vpop.permute.xlu0 %311
    %313 = vrot.lane.b32.xlu0 %v198, 64
    %v314 = vpop.permute.xlu0 %313
    %v316 = vsel %vm202, %v312, 0
    %v319 = vsel %vm202, %v314, 0
    %321 = vmatprep.subr.bf16.mxu0 0
    %322 = vmatpush1.bf16.xpose.msra.mxu0 0
    %323 = vmatprep.subr.bf16.mxu0 0
    %324 = vmatpush1.bf16.xpose.msra.mxu0 0
    %325 = vmatprep.subr.bf16.mxu0 0
    %326 = vmatpush1.bf16.xpose.msra.mxu0 0
    %327 = vmatprep.subr.bf16.mxu0 0
    %328 = vmatpush1.bf16.xpose.msra.mxu0 0
    %329 = vmatprep.subr.bf16.mxu0 0
    %330 = vmatpush1.bf16.xpose.msra.mxu0 0
    %331 = vmatprep.subr.bf16.mxu0 0
    %332 = vmatpush1.bf16.xpose.msra.mxu0 0
    %333 = vmatprep.subr.bf16.mxu0 0
    %334 = vmatpush1.bf16.xpose.msra.mxu0 0
    %335 = vmatprep.subr.bf16.mxu0 0
    %336 = vmatpush1.bf16.xpose.msra.mxu0 %v319
    %337 = vmatprep.subr.bf16.mxu0 0
    %338 = vmatpush2.bf16.xpose.msra.mxu0 0
    %339 = vmatprep.subr.bf16.mxu0 0
    %340 = vmatpush2.bf16.xpose.msra.mxu0 0
    %341 = vmatprep.subr.bf16.mxu0 0
    %342 = vmatpush2.bf16.xpose.msra.mxu0 0
    %343 = vmatprep.subr.bf16.mxu0 0
    %344 = vmatpush2.bf16.xpose.msra.mxu0 0
    %345 = vmatprep.subr.bf16.mxu0 0
    %346 = vmatpush2.bf16.xpose.msra.mxu0 0
    %347 = vmatprep.subr.bf16.mxu0 0
    %348 = vmatpush2.bf16.xpose.msra.mxu0 0
    %349 = vmatprep.subr.bf16.mxu0 0
    %350 = vmatpush2.bf16.xpose.msra.mxu0 0
    %351 = vmatprep.subr.bf16.mxu0 0
    %352 = vmatpush2.bf16.xpose.msra.mxu0 0
    %353 = vmatprep.mubr.bf16.mxu0 0
    %354 = vmatmul.mubr.bf16.gmra.mxu0 %v316
    %v355 = vpop.f32.mrf.mxu0
    %v356 = vadd.f32 %v122, %v355
    %v357 = vpop.f32.mrf.mxu0
    %v358 = vpop.f32.mrf.mxu0
    %v359 = vpop.f32.mrf.mxu0
    %360 = vdwg.mxu0
    %v361 = vsel %vm249, %v356, -inf
    %362 = vmax.xlane.f32.xlu0 %v361
    %v363 = vpop.xlane.xlu0 %362
    %v364 = vsub.f32 %v356, %v363
    %v365 = vmul.f32 %v364, 1.442695
    %v366 = vpow.pop %v365
    %v367 = vsel %vm249, %v366, 0.0
    %368 = vadd.xlane.f32.xlu0 %v367
    %v369 = vpop.xlane.xlu0 %368
    %v370 = vrcp.pop %v369
    %v371 = vmul.f32 %v366, %v370
    %v372 = vpack.c.bf16 %v371, %v371
    %373 = vrot.lane.b32.xlu0 %v198, 48
    %v374 = vpop.permute.xlu0 %373
    %v376 = vsel %vm249, %v372, 0
    %v379 = vsel %vm267, %v374, 0
    %381 = vmatprep.subr.bf16.mxu0 0
    %382 = vmatpush1.bf16.msra.mxu0 0
    %383 = vmatprep.subr.bf16.mxu0 0
    %384 = vmatpush1.bf16.msra.mxu0 0
    %385 = vmatprep.subr.bf16.mxu0 0
    %386 = vmatpush1.bf16.msra.mxu0 0
    %387 = vmatprep.subr.bf16.mxu0 0
    %388 = vmatpush1.bf16.msra.mxu0 0
    %389 = vmatprep.subr.bf16.mxu0 0
    %390 = vmatpush1.bf16.msra.mxu0 0
    %391 = vmatprep.subr.bf16.mxu0 0
    %392 = vmatpush1.bf16.msra.mxu0 0
    %393 = vmatprep.subr.bf16.mxu0 0
    %394 = vmatpush1.bf16.msra.mxu0 0
    %395 = vmatprep.subr.bf16.mxu0 0
    %396 = vmatpush1.bf16.msra.mxu0 %v379
    %397 = vmatprep.subr.bf16.mxu0 0
    %398 = vmatpush2.bf16.msra.mxu0 0
    %399 = vmatprep.subr.bf16.mxu0 0
    %400 = vmatpush2.bf16.msra.mxu0 0
    %401 = vmatprep.subr.bf16.mxu0 0
    %402 = vmatpush2.bf16.msra.mxu0 0
    %403 = vmatprep.subr.bf16.mxu0 0
    %404 = vmatpush2.bf16.msra.mxu0 0
    %405 = vmatprep.subr.bf16.mxu0 0
    %406 = vmatpush2.bf16.msra.mxu0 0
    %407 = vmatprep.subr.bf16.mxu0 0
    %408 = vmatpush2.bf16.msra.mxu0 0
    %409 = vmatprep.subr.bf16.mxu0 0
    %410 = vmatpush2.bf16.msra.mxu0 0
    %411 = vmatprep.subr.bf16.mxu0 0
    %412 = vmatpush2.bf16.msra.mxu0 0
    %413 = vmatprep.mubr.bf16.mxu0 0
    %414 = vmatmul.mubr.bf16.gmra.mxu0 %v376
    %v415 = vpop.f32.mrf.mxu0
    %v416 = vadd.f32 0.0, %v415
    %v417 = vpop.f32.mrf.mxu0
    %v418 = vpop.f32.mrf.mxu0
    %v419 = vpop.f32.mrf.mxu0
    %420 = vdwg.mxu0
    %422 = vrot.lane.b32.xlu0 %v416, 16
    %v423 = vpop.permute.xlu0 %422
    %v425 = vsel %vm202, %v306, %v423
    %v426 = vpack.c.bf16 %v195, %v195
    %428 = vrot.lane.b32.xlu0 %v426, 112
    %v429 = vpop.permute.xlu0 %428
    %v431 = vsel %vm202, %v426, 0
    %v434 = vsel %vm202, %v429, 0
    %436 = vmatprep.subr.bf16.mxu0 0
    %437 = vmatpush1.bf16.xpose.msra.mxu0 0
    %438 = vmatprep.subr.bf16.mxu0 0
    %439 = vmatpush1.bf16.xpose.msra.mxu0 0
    %440 = vmatprep.subr.bf16.mxu0 0
    %441 = vmatpush1.bf16.xpose.msra.mxu0 0
    %442 = vmatprep.subr.bf16.mxu0 0
    %443 = vmatpush1.bf16.xpose.msra.mxu0 0
    %444 = vmatprep.subr.bf16.mxu0 0
    %445 = vmatpush1.bf16.xpose.msra.mxu0 0
    %446 = vmatprep.subr.bf16.mxu0 0
    %447 = vmatpush1.bf16.xpose.msra.mxu0 0
    %448 = vmatprep.subr.bf16.mxu0 0
    %449 = vmatpush1.bf16.xpose.msra.mxu0 0
    %450 = vmatprep.subr.bf16.mxu0 0
    %451 = vmatpush1.bf16.xpose.msra.mxu0 %v434
    %452 = vmatprep.subr.bf16.mxu0 0
    %453 = vmatpush2.bf16.xpose.msra.mxu0 0
    %454 = vmatprep.subr.bf16.mxu0 0
    %455 = vmatpush2.bf16.xpose.msra.mxu0 0
    %456 = vmatprep.subr.bf16.mxu0 0
    %457 = vmatpush2.bf16.xpose.msra.mxu0 0
    %458 = vmatprep.subr.bf16.mxu0 0
    %459 = vmatpush2.bf16.xpose.msra.mxu0 0
    %460 = vmatprep.subr.bf16.mxu0 0
    %461 = vmatpush2.bf16.xpose.msra.mxu0 0
    %462 = vmatprep.subr.bf16.mxu0 0
    %463 = vmatpush2.bf16.xpose.msra.mxu0 0
    %464 = vmatprep.subr.bf16.mxu0 0
    %465 = vmatpush2.bf16.xpose.msra.mxu0 0
    %466 = vmatprep.subr.bf16.mxu0 0
    %467 = vmatpush2.bf16.xpose.msra.mxu0 0
    %468 = vmatprep.mubr.bf16.mxu0 0
    %469 = vmatmul.mubr.bf16.gmra.mxu0 %v431
    %v470 = vpop.f32.mrf.mxu0
    %v471 = vadd.f32 %v128, %v470
    %v472 = vpop.f32.mrf.mxu0
    %v473 = vpop.f32.mrf.mxu0
    %v474 = vpop.f32.mrf.mxu0
    %475 = vdwg.mxu0
    %v476 = vsel %vm249, %v471, -inf
    %477 = vmax.xlane.f32.xlu0 %v476
    %v478 = vpop.xlane.xlu0 %477
    %v479 = vsub.f32 %v471, %v478
    %v480 = vmul.f32 %v479, 1.442695
    %v481 = vpow.pop %v480
    %v482 = vsel %vm249, %v481, 0.0
    %483 = vadd.xlane.f32.xlu0 %v482
    %v484 = vpop.xlane.xlu0 %483
    %v485 = vrcp.pop %v484
    %v486 = vmul.f32 %v481, %v485
    %v487 = vpack.c.bf16 %v486, %v486
    %488 = vrot.lane.b32.xlu0 %v426, 96
    %v489 = vpop.permute.xlu0 %488
    %v491 = vsel %vm249, %v487, 0
    %v494 = vsel %vm267, %v489, 0
    %496 = vmatprep.subr.bf16.mxu0 0
    %497 = vmatpush1.bf16.msra.mxu0 0
    %498 = vmatprep.subr.bf16.mxu0 0
    %499 = vmatpush1.bf16.msra.mxu0 0
    %500 = vmatprep.subr.bf16.mxu0 0
    %501 = vmatpush1.bf16.msra.mxu0 0
    %502 = vmatprep.subr.bf16.mxu0 0
    %503 = vmatpush1.bf16.msra.mxu0 0
    %504 = vmatprep.subr.bf16.mxu0 0
    %505 = vmatpush1.bf16.msra.mxu0 0
    %506 = vmatprep.subr.bf16.mxu0 0
    %507 = vmatpush1.bf16.msra.mxu0 0
    %508 = vmatprep.subr.bf16.mxu0 0
    %509 = vmatpush1.bf16.msra.mxu0 0
    %510 = vmatprep.subr.bf16.mxu0 0
    %511 = vmatpush1.bf16.msra.mxu0 %v494
    %512 = vmatprep.subr.bf16.mxu0 0
    %513 = vmatpush2.bf16.msra.mxu0 0
    %514 = vmatprep.subr.bf16.mxu0 0
    %515 = vmatpush2.bf16.msra.mxu0 0
    %516 = vmatprep.subr.bf16.mxu0 0
    %517 = vmatpush2.bf16.msra.mxu0 0
    %518 = vmatprep.subr.bf16.mxu0 0
    %519 = vmatpush2.bf16.msra.mxu0 0
    %520 = vmatprep.subr.bf16.mxu0 0
    %521 = vmatpush2.bf16.msra.mxu0 0
    %522 = vmatprep.subr.bf16.mxu0 0
    %523 = vmatpush2.bf16.msra.mxu0 0
    %524 = vmatprep.subr.bf16.mxu0 0
    %525 = vmatpush2.bf16.msra.mxu0 0
    %526 = vmatprep.subr.bf16.mxu0 0
    %527 = vmatpush2.bf16.msra.mxu0 0
    %528 = vmatprep.mubr.bf16.mxu0 0
    %529 = vmatmul.mubr.bf16.gmra.mxu0 %v491
    %v530 = vpop.f32.mrf.mxu0
    %v531 = vadd.f32 0.0, %v530
    %v532 = vpop.f32.mrf.mxu0
    %v533 = vpop.f32.mrf.mxu0
    %v534 = vpop.f32.mrf.mxu0
    %535 = vdwg.mxu0
    %536 = vrot.lane.b32.xlu0 %v426, 80
    %v537 = vpop.permute.xlu0 %536
    %538 = vrot.lane.b32.xlu0 %v426, 64
    %v539 = vpop.permute.xlu0 %538
    %v541 = vsel %vm202, %v537, 0
    %v544 = vsel %vm202, %v539, 0
    %546 = vmatprep.subr.bf16.mxu0 0
    %547 = vmatpush1.bf16.xpose.msra.mxu0 0
    %548 = vmatprep.subr.bf16.mxu0 0
    %549 = vmatpush1.bf16.xpose.msra.mxu0 0
    %550 = vmatprep.subr.bf16.mxu0 0
    %551 = vmatpush1.bf16.xpose.msra.mxu0 0
    %552 = vmatprep.subr.bf16.mxu0 0
    %553 = vmatpush1.bf16.xpose.msra.mxu0 0
    %554 = vmatprep.subr.bf16.mxu0 0
    %555 = vmatpush1.bf16.xpose.msra.mxu0 0
    %556 = vmatprep.subr.bf16.mxu0 0
    %557 = vmatpush1.bf16.xpose.msra.mxu0 0
    %558 = vmatprep.subr.bf16.mxu0 0
    %559 = vmatpush1.bf16.xpose.msra.mxu0 0
    %560 = vmatprep.subr.bf16.mxu0 0
    %561 = vmatpush1.bf16.xpose.msra.mxu0 %v544
    %562 = vmatprep.subr.bf16.mxu0 0
    %563 = vmatpush2.bf16.xpose.msra.mxu0 0
    %564 = vmatprep.subr.bf16.mxu0 0
    %565 = vmatpush2.bf16.xpose.msra.mxu0 0
    %566 = vmatprep.subr.bf16.mxu0 0
    %567 = vmatpush2.bf16.xpose.msra.mxu0 0
    %568 = vmatprep.subr.bf16.mxu0 0
    %569 = vmatpush2.bf16.xpose.msra.mxu0 0
    %570 = vmatprep.subr.bf16.mxu0 0
    %571 = vmatpush2.bf16.xpose.msra.mxu0 0
    %572 = vmatprep.subr.bf16.mxu0 0
    %573 = vmatpush2.bf16.xpose.msra.mxu0 0
    %574 = vmatprep.subr.bf16.mxu0 0
    %575 = vmatpush2.bf16.xpose.msra.mxu0 0
    %576 = vmatprep.subr.bf16.mxu0 0
    %577 = vmatpush2.bf16.xpose.msra.mxu0 0
    %578 = vmatprep.mubr.bf16.mxu0 0
    %579 = vmatmul.mubr.bf16.gmra.mxu0 %v541
    %v580 = vpop.f32.mrf.mxu0
    %v581 = vadd.f32 %v128, %v580
    %v582 = vpop.f32.mrf.mxu0
    %v583 = vpop.f32.mrf.mxu0
    %v584 = vpop.f32.mrf.mxu0
    %585 = vdwg.mxu0
    %v586 = vsel %vm249, %v581, -inf
    %587 = vmax.xlane.f32.xlu0 %v586
    %v588 = vpop.xlane.xlu0 %587
    %v589 = vsub.f32 %v581, %v588
    %v590 = vmul.f32 %v589, 1.442695
    %v591 = vpow.pop %v590
    %v592 = vsel %vm249, %v591, 0.0
    %593 = vadd.xlane.f32.xlu0 %v592
    %v594 = vpop.xlane.xlu0 %593
    %v595 = vrcp.pop %v594
    %v596 = vmul.f32 %v591, %v595
    %v597 = vpack.c.bf16 %v596, %v596
    %598 = vrot.lane.b32.xlu0 %v426, 48
    %v599 = vpop.permute.xlu0 %598
    %v601 = vsel %vm249, %v597, 0
    %v604 = vsel %vm267, %v599, 0
    %606 = vmatprep.subr.bf16.mxu0 0
    %607 = vmatpush1.bf16.msra.mxu0 0
    %608 = vmatprep.subr.bf16.mxu0 0
    %609 = vmatpush1.bf16.msra.mxu0 0
    %610 = vmatprep.subr.bf16.mxu0 0
    %611 = vmatpush1.bf16.msra.mxu0 0
    %612 = vmatprep.subr.bf16.mxu0 0
    %613 = vmatpush1.bf16.msra.mxu0 0
    %614 = vmatprep.subr.bf16.mxu0 0
    %615 = vmatpush1.bf16.msra.mxu0 0
    %616 = vmatprep.subr.bf16.mxu0 0
    %617 = vmatpush1.bf16.msra.mxu0 0
    %618 = vmatprep.subr.bf16.mxu0 0
    %619 = vmatpush1.bf16.msra.mxu0 0
    %620 = vmatprep.subr.bf16.mxu0 0
    %621 = vmatpush1.bf16.msra.mxu0 %v604
    %622 = vmatprep.subr.bf16.mxu0 0
    %623 = vmatpush2.bf16.msra.mxu0 0
    %624 = vmatprep.subr.bf16.mxu0 0
    %625 = vmatpush2.bf16.msra.mxu0 0
    %626 = vmatprep.subr.bf16.mxu0 0
    %627 = vmatpush2.bf16.msra.mxu0 0
    %628 = vmatprep.subr.bf16.mxu0 0
    %629 = vmatpush2.bf16.msra.mxu0 0
    %630 = vmatprep.subr.bf16.mxu0 0
    %631 = vmatpush2.bf16.msra.mxu0 0
    %632 = vmatprep.subr.bf16.mxu0 0
    %633 = vmatpush2.bf16.msra.mxu0 0
    %634 = vmatprep.subr.bf16.mxu0 0
    %635 = vmatpush2.bf16.msra.mxu0 0
    %636 = vmatprep.subr.bf16.mxu0 0
    %637 = vmatpush2.bf16.msra.mxu0 0
    %638 = vmatprep.mubr.bf16.mxu0 0
    %639 = vmatmul.mubr.bf16.gmra.mxu0 %v601
    %v640 = vpop.f32.mrf.mxu0
    %v641 = vadd.f32 0.0, %v640
    %v642 = vpop.f32.mrf.mxu0
    %v643 = vpop.f32.mrf.mxu0
    %v644 = vpop.f32.mrf.mxu0
    %645 = vdwg.mxu0
    %647 = vrot.lane.b32.xlu0 %v641, 16
    %v648 = vpop.permute.xlu0 %647
    %v650 = vsel %vm202, %v531, %v648
    %v651 = vpack.c.bf16 %v650, %v425
    %v652 = vld [vmem:[%s6] sm:$0xf]
    %v653 = vld [vmem:[%s6 + $0x4] sm:$0xf]
    %v654 = vld [vmem:[%s6 + $0x8] sm:$0xf]
    %v655 = vld [vmem:[%s6 + $0xc] sm:$0xf]
    %v656 = vld [vmem:[%s7] sm:$0x1]
    %v658 = vlaneseq
    %v659 = vshrl.u32 %v658, 7
    %v660 = vsub.s32 0, %v659
    %v661 = vrot.slane %v656, %v660
    %v667 = vunpack.c.l.b16 %v652
    %v668 = vunpack.c.l.b16 %v653
    %v669 = vunpack.c.l.b16 %v654
    %v670 = vunpack.c.l.b16 %v655
    %v671 = vpack.c.b16 %v668, %v667
    %v672 = vpack.c.b16 %v670, %v669
    %v676 = vsel %vm68, %v651, 0
    %678 = vmatprep.subr.bf16.mxu0 0
    %679 = vmatpush1.bf16.msra.mxu0 0
    %680 = vmatprep.subr.bf16.mxu0 0
    %681 = vmatpush1.bf16.msra.mxu0 0
    %682 = vmatprep.subr.bf16.mxu0 0
    %683 = vmatpush1.bf16.msra.mxu0 0
    %684 = vmatprep.subr.bf16.mxu0 0
    %685 = vmatpush1.bf16.msra.mxu0 0
    %686 = vmatprep.subr.bf16.mxu0 0
    %687 = vmatpush1.bf16.msra.mxu0 0
    %688 = vmatprep.subr.bf16.mxu0 0
    %689 = vmatpush1.bf16.msra.mxu0 0
    %690 = vmatprep.subr.bf16.mxu0 0
    %691 = vmatpush1.bf16.msra.mxu0 %v672
    %692 = vmatprep.subr.bf16.mxu0 0
    %693 = vmatpush1.bf16.msra.mxu0 %v671
    %694 = vmatprep.subr.bf16.mxu0 0
    %695 = vmatpush2.bf16.msra.mxu0 0
    %696 = vmatprep.subr.bf16.mxu0 0
    %697 = vmatpush2.bf16.msra.mxu0 0
    %698 = vmatprep.subr.bf16.mxu0 0
    %699 = vmatpush2.bf16.msra.mxu0 0
    %700 = vmatprep.subr.bf16.mxu0 0
    %701 = vmatpush2.bf16.msra.mxu0 0
    %702 = vmatprep.subr.bf16.mxu0 0
    %703 = vmatpush2.bf16.msra.mxu0 0
    %704 = vmatprep.subr.bf16.mxu0 0
    %705 = vmatpush2.bf16.msra.mxu0 0
    %706 = vmatprep.subr.bf16.mxu0 0
    %707 = vmatpush2.bf16.msra.mxu0 0
    %708 = vmatprep.subr.bf16.mxu0 0
    %709 = vmatpush2.bf16.msra.mxu0 0
    %710 = vmatprep.mubr.bf16.mxu0 0
    %711 = vmatmul.mubr.bf16.gmra.mxu0 %v676
    %v712 = vpop.f32.mrf.mxu0
    %v713 = vadd.f32 %v661, %v712
    %v714 = vpop.f32.mrf.mxu0
    %v715 = vpop.f32.mrf.mxu0
    %v716 = vadd.f32 %v661, %v715
    %v717 = vpop.f32.mrf.mxu0
    %718 = vdwg.mxu0
    %v719 = vadd.f32 %v713, %v110
    %v720 = vadd.f32 %v716, %v111
    %v721 = vld [vmem:[%s8] sm:$0x1]
    %v722 = vld [vmem:[%s9] sm:$0x1]
    %v723 = vsel %vm68, %v719, 0.0
    %724 = vadd.xlane.f32.xlu0 %v723
    %v725 = vpop.xlane.xlu0 %724
    %v726 = vsel %vm68, %v720, 0.0
    %727 = vadd.xlane.f32.xlu0 %v726
    %v728 = vpop.xlane.xlu0 %727
    %v729 = vmul.f32 %v725, %v75
    %v730 = vmul.f32 %v728, %v75
    %v731 = vsub.f32 %v719, %v729
    %v732 = vsub.f32 %v720, %v730
    %v733 = vmul.f32 %v731, %v731
    %v734 = vmul.f32 %v732, %v732
    %v735 = vsel %vm68, %v733, 0.0
    %736 = vadd.xlane.f32.xlu0 %v735
    %v737 = vpop.xlane.xlu0 %736
    %v738 = vsel %vm68, %v734, 0.0
    %739 = vadd.xlane.f32.xlu0 %v738
    %v740 = vpop.xlane.xlu0 %739
    %v741 = vmul.f32 %v737, %v75
    %v742 = vmul.f32 %v740, %v75
    %v743 = vadd.f32 %v741, 1e-12
    %v744 = vadd.f32 %v742, 1e-12
    %v745 = vrsqrt.pop %v743
    %v746 = vrsqrt.pop %v744
    %v747 = vmul.f32 %v731, %v745
    %v748 = vmul.f32 %v732, %v746
    %v750 = vlaneseq
    %v751 = vshrl.u32 %v750, 7
    %v752 = vsub.s32 0, %v751
    %v753 = vrot.slane %v721, %v752
    %v755 = vmul.f32 %v747, %v753
    %v756 = vmul.f32 %v748, %v753
    %v758 = vlaneseq
    %v759 = vshrl.u32 %v758, 7
    %v760 = vsub.s32 0, %v759
    %v761 = vrot.slane %v722, %v760
    %v763 = vadd.f32 %v755, %v761
    %v764 = vadd.f32 %v756, %v761
    %v765 = vpack.c.bf16 %v764, %v763
    %v766 = vld [vmem:[%s10] sm:$0xf]
    %v767 = vld [vmem:[%s10 + $0x4] sm:$0xf]
    %v768 = vld [vmem:[%s10 + $0x8] sm:$0xf]
    %v769 = vld [vmem:[%s10 + $0xc] sm:$0xf]
    %v770 = vld [vmem:[%s11] sm:$0x1]
    %v772 = vlaneseq
    %v773 = vshrl.u32 %v772, 7
    %v774 = vsub.s32 0, %v773
    %v775 = vrot.slane %v770, %v774
    %v781 = vunpack.c.l.b16 %v766
    %v782 = vunpack.c.l.b16 %v767
    %v783 = vunpack.c.l.b16 %v768
    %v784 = vunpack.c.l.b16 %v769
    %v785 = vpack.c.b16 %v782, %v781
    %v786 = vpack.c.b16 %v784, %v783
    %v790 = vsel %vm68, %v765, 0
    %792 = vmatprep.subr.bf16.mxu0 0
    %793 = vmatpush1.bf16.msra.mxu0 0
    %794 = vmatprep.subr.bf16.mxu0 0
    %795 = vmatpush1.bf16.msra.mxu0 0
    %796 = vmatprep.subr.bf16.mxu0 0
    %797 = vmatpush1.bf16.msra.mxu0 0
    %798 = vmatprep.subr.bf16.mxu0 0
    %799 = vmatpush1.bf16.msra.mxu0 0
    %800 = vmatprep.subr.bf16.mxu0 0
    %801 = vmatpush1.bf16.msra.mxu0 0
    %802 = vmatprep.subr.bf16.mxu0 0
    %803 = vmatpush1.bf16.msra.mxu0 0
    %804 = vmatprep.subr.bf16.mxu0 0
    %805 = vmatpush1.bf16.msra.mxu0 %v786
    %806 = vmatprep.subr.bf16.mxu0 0
    %807 = vmatpush1.bf16.msra.mxu0 %v785
    %808 = vmatprep.subr.bf16.mxu0 0
    %809 = vmatpush2.bf16.msra.mxu0 0
    %810 = vmatprep.subr.bf16.mxu0 0
    %811 = vmatpush2.bf16.msra.mxu0 0
    %812 = vmatprep.subr.bf16.mxu0 0
    %813 = vmatpush2.bf16.msra.mxu0 0
    %814 = vmatprep.subr.bf16.mxu0 0
    %815 = vmatpush2.bf16.msra.mxu0 0
    %816 = vmatprep.subr.bf16.mxu0 0
    %817 = vmatpush2.bf16.msra.mxu0 0
    %818 = vmatprep.subr.bf16.mxu0 0
    %819 = vmatpush2.bf16.msra.mxu0 0
    %820 = vmatprep.subr.bf16.mxu0 0
    %821 = vmatpush2.bf16.msra.mxu0 0
    %822 = vmatprep.subr.bf16.mxu0 0
    %823 = vmatpush2.bf16.msra.mxu0 0
    %824 = vmatprep.mubr.bf16.mxu0 0
    %825 = vmatmul.mubr.bf16.gmra.mxu0 %v790
    %v826 = vpop.f32.mrf.mxu0
    %v827 = vadd.f32 %v775, %v826
    %v828 = vpop.f32.mrf.mxu0
    %v829 = vpop.f32.mrf.mxu0
    %v830 = vadd.f32 %v775, %v829
    %v831 = vpop.f32.mrf.mxu0
    %832 = vdwg.mxu0
    %v833 = vmul.f32 %v827, %v827
    %v834 = vmul.f32 %v830, %v830
    %v835 = vmul.f32 %v827, %v833
    %v836 = vmul.f32 %v830, %v834
    %v837 = vmul.f32 %v835, 0.044715
    %v838 = vmul.f32 %v836, 0.044715
    %v839 = vadd.f32 %v827, %v837
    %v840 = vadd.f32 %v830, %v838
    %v841 = vmul.f32 %v839, 0.7978846
    %v842 = vmul.f32 %v840, 0.7978846
    %v843 = vtanh.pop %v841
    %v844 = vtanh.pop %v842
    %v845 = vadd.f32 %v843, 1.0
    %v846 = vadd.f32 %v844, 1.0
    %v847 = vmul.f32 %v845, 0.5
    %v848 = vmul.f32 %v846, 0.5
    %v849 = vmul.f32 %v827, %v847
    %v850 = vmul.f32 %v830, %v848
    %v851 = vpack.c.bf16 %v850, %v849
    %v852 = vld [vmem:[%s12] sm:$0xf]
    %v853 = vld [vmem:[%s12 + $0x4] sm:$0xf]
    %v854 = vld [vmem:[%s12 + $0x8] sm:$0xf]
    %v855 = vld [vmem:[%s12 + $0xc] sm:$0xf]
    %v856 = vld [vmem:[%s12 + $0x10] sm:$0xf]
    %v857 = vld [vmem:[%s12 + $0x14] sm:$0xf]
    %v858 = vld [vmem:[%s12 + $0x18] sm:$0xf]
    %v859 = vld [vmem:[%s12 + $0x1c] sm:$0xf]
    %v860 = vld [vmem:[%s13] sm:$0x1]
    %v862 = vlaneseq
    %v863 = vshrl.u32 %v862, 7
    %v864 = vsub.s32 0, %v863
    %v865 = vrot.slane %v860, %v864
    %v875 = vunpack.c.l.b16 %v852
    %v876 = vunpack.c.l.b16 %v853
    %v877 = vunpack.c.l.b16 %v854
    %v878 = vunpack.c.l.b16 %v855
    %v879 = vunpack.c.l.b16 %v856
    %v880 = vunpack.c.l.b16 %v857
    %v881 = vunpack.c.l.b16 %v858
    %v882 = vunpack.c.l.b16 %v859
    %v883 = vpack.c.b16 %v876, %v875
    %v884 = vpack.c.b16 %v878, %v877
    %v885 = vpack.c.b16 %v880, %v879
    %v886 = vpack.c.b16 %v882, %v881
    %vm891 = vcmask 523264
    %v893 = vsel %vm891, %v851, 0
    %895 = vmatprep.subr.bf16.mxu0 0
    %896 = vmatpush1.bf16.msra.mxu0 0
    %897 = vmatprep.subr.bf16.mxu0 0
    %898 = vmatpush1.bf16.msra.mxu0 0
    %899 = vmatprep.subr.bf16.mxu0 0
    %900 = vmatpush1.bf16.msra.mxu0 0
    %901 = vmatprep.subr.bf16.mxu0 0
    %902 = vmatpush1.bf16.msra.mxu0 0
    %903 = vmatprep.subr.bf16.mxu0 0
    %904 = vmatpush1.bf16.msra.mxu0 %v886
    %905 = vmatprep.subr.bf16.mxu0 0
    %906 = vmatpush1.bf16.msra.mxu0 %v885
    %907 = vmatprep.subr.bf16.mxu0 0
    %908 = vmatpush1.bf16.msra.mxu0 %v884
    %909 = vmatprep.subr.bf16.mxu0 0
    %910 = vmatpush1.bf16.msra.mxu0 %v883
    %911 = vmatprep.subr.bf16.mxu0 0
    %912 = vmatpush2.bf16.msra.mxu0 0
    %913 = vmatprep.subr.bf16.mxu0 0
    %914 = vmatpush2.bf16.msra.mxu0 0
    %915 = vmatprep.subr.bf16.mxu0 0
    %916 = vmatpush2.bf16.msra.mxu0 0
    %917 = vmatprep.subr.bf16.mxu0 0
    %918 = vmatpush2.bf16.msra.mxu0 0
    %919 = vmatprep.subr.bf16.mxu0 0
    %920 = vmatpush2.bf16.msra.mxu0 0
    %921 = vmatprep.subr.bf16.mxu0 0
    %922 = vmatpush2.bf16.msra.mxu0 0
    %923 = vmatprep.subr.bf16.mxu0 0
    %924 = vmatpush2.bf16.msra.mxu0 0
    %925 = vmatprep.subr.bf16.mxu0 0
    %926 = vmatpush2.bf16.msra.mxu0 0
    %927 = vmatprep.mubr.bf16.mxu0 0
    %928 = vmatmul.mubr.bf16.gmra.mxu0 %v893
    %v929 = vpop.f32.mrf.mxu0
    %v930 = vadd.f32 %v865, %v929
    %v931 = vpop.f32.mrf.mxu0
    %v932 = vpop.f32.mrf.mxu0
    %v933 = vadd.f32 %v865, %v932
    %v934 = vpop.f32.mrf.mxu0
    %935 = vdwg.mxu0
    %v936 = vadd.f32 %v930, %v763
    %v937 = vadd.f32 %v933, %v764
    %v938 = vld [vmem:[%s14] sm:$0x1]
    %v939 = vld [vmem:[%s15] sm:$0x1]
    %v940 = vsel %vm68, %v936, 0.0
    %941 = vadd.xlane.f32.xlu0 %v940
    %v942 = vpop.xlane.xlu0 %941
    %v943 = vsel %vm68, %v937, 0.0
    %944 = vadd.xlane.f32.xlu0 %v943
    %v945 = vpop.xlane.xlu0 %944
    %v946 = vmul.f32 %v942, %v75
    %v947 = vmul.f32 %v945, %v75
    %v948 = vsub.f32 %v936, %v946
    %v949 = vsub.f32 %v937, %v947
    %v950 = vmul.f32 %v948, %v948
    %v951 = vmul.f32 %v949, %v949
    %v952 = vsel %vm68, %v950, 0.0
    %953 = vadd.xlane.f32.xlu0 %v952
    %v954 = vpop.xlane.xlu0 %953
    %v955 = vsel %vm68, %v951, 0.0
    %956 = vadd.xlane.f32.xlu0 %v955
    %v957 = vpop.xlane.xlu0 %956
    %v958 = vmul.f32 %v954, %v75
    %v959 = vmul.f32 %v957, %v75
    %v960 = vadd.f32 %v958, 1e-12
    %v961 = vadd.f32 %v959, 1e-12
    %v962 = vrsqrt.pop %v960
    %v963 = vrsqrt.pop %v961
    %v964 = vmul.f32 %v948, %v962
    %v965 = vmul.f32 %v949, %v963
    %v967 = vlaneseq
    %v968 = vshrl.u32 %v967, 7
    %v969 = vsub.s32 0, %v968
    %v970 = vrot.slane %v938, %v969
    %v972 = vmul.f32 %v964, %v970
    %v973 = vmul.f32 %v965, %v970
    %v975 = vlaneseq
    %v976 = vshrl.u32 %v975, 7
    %v977 = vsub.s32 0, %v976
    %v978 = vrot.slane %v939, %v977
    %v980 = vadd.f32 %v972, %v978
    %v981 = vadd.f32 %v973, %v978
    %v982 = vpack.c.bf16 %v981, %v980
    %s983 = scalar_lea.vmem %s4, 16
    %v984 = vld [vmem:[%s983] sm:$0xf]
    %v985 = vld [vmem:[%s983 + $0x4] sm:$0xf]
    %v986 = vld [vmem:[%s983 + $0x8] sm:$0xf]
    %v987 = vld [vmem:[%s983 + $0xc] sm:$0xf]
    %s988 = scalar_lea.vmem %s5, 1
    %v989 = vld [vmem:[%s988] sm:$0x1]
    %v991 = vlaneseq
    %v992 = vshrl.u32 %v991, 7
    %v993 = vsub.s32 0, %v992
    %v994 = vrot.slane %v989, %v993
    %v1000 = vunpack.c.l.b16 %v984
    %v1001 = vunpack.c.l.b16 %v985
    %v1002 = vunpack.c.l.b16 %v986
    %v1003 = vunpack.c.l.b16 %v987
    %v1004 = vpack.c.b16 %v1001, %v1000
    %v1005 = vpack.c.b16 %v1003, %v1002
    %v1009 = vsel %vm68, %v982, 0
    %1011 = vmatprep.subr.bf16.mxu0 0
    %1012 = vmatpush1.bf16.msra.mxu0 0
    %1013 = vmatprep.subr.bf16.mxu0 0
    %1014 = vmatpush1.bf16.msra.mxu0 0
    %1015 = vmatprep.subr.bf16.mxu0 0
    %1016 = vmatpush1.bf16.msra.mxu0 0
    %1017 = vmatprep.subr.bf16.mxu0 0
    %1018 = vmatpush1.bf16.msra.mxu0 0
    %1019 = vmatprep.subr.bf16.mxu0 0
    %1020 = vmatpush1.bf16.msra.mxu0 0
    %1021 = vmatprep.subr.bf16.mxu0 0
    %1022 = vmatpush1.bf16.msra.mxu0 0
    %1023 = vmatprep.subr.bf16.mxu0 0
    %1024 = vmatpush1.bf16.msra.mxu0 %v1005
    %1025 = vmatprep.subr.bf16.mxu0 0
    %1026 = vmatpush1.bf16.msra.mxu0 %v1004
    %1027 = vmatprep.subr.bf16.mxu0 0
    %1028 = vmatpush2.bf16.msra.mxu0 0
    %1029 = vmatprep.subr.bf16.mxu0 0
    %1030 = vmatpush2.bf16.msra.mxu0 0
    %1031 = vmatprep.subr.bf16.mxu0 0
    %1032 = vmatpush2.bf16.msra.mxu0 0
    %1033 = vmatprep.subr.bf16.mxu0 0
    %1034 = vmatpush2.bf16.msra.mxu0 0
    %1035 = vmatprep.subr.bf16.mxu0 0
    %1036 = vmatpush2.bf16.msra.mxu0 0
    %1037 = vmatprep.subr.bf16.mxu0 0
    %1038 = vmatpush2.bf16.msra.mxu0 0
    %1039 = vmatprep.subr.bf16.mxu0 0
    %1040 = vmatpush2.bf16.msra.mxu0 0
    %1041 = vmatprep.subr.bf16.mxu0 0
    %1042 = vmatpush2.bf16.msra.mxu0 0
    %1043 = vmatprep.mubr.bf16.mxu0 0
    %1044 = vmatmul.mubr.bf16.gmra.mxu0 %v1009
    %v1045 = vpop.f32.mrf.mxu0
    %v1046 = vadd.f32 %v994, %v1045
    %v1047 = vpop.f32.mrf.mxu0
    %v1048 = vpop.f32.mrf.mxu0
    %v1049 = vadd.f32 %v994, %v1048
    %v1050 = vpop.f32.mrf.mxu0
    %1051 = vdwg.mxu0
    %v1052 = vpack.c.bf16 %v1046, %v1046
    %1054 = vrot.lane.b32.xlu0 %v1052, 112
    %v1055 = vpop.permute.xlu0 %1054
    %v1057 = vsel %vm202, %v1052, 0
    %v1060 = vsel %vm202, %v1055, 0
    %1062 = vmatprep.subr.bf16.mxu0 0
    %1063 = vmatpush1.bf16.xpose.msra.mxu0 0
    %1064 = vmatprep.subr.bf16.mxu0 0
    %1065 = vmatpush1.bf16.xpose.msra.mxu0 0
    %1066 = vmatprep.subr.bf16.mxu0 0
    %1067 = vmatpush1.bf16.xpose.msra.mxu0 0
    %1068 = vmatprep.subr.bf16.mxu0 0
    %1069 = vmatpush1.bf16.xpose.msra.mxu0 0
    %1070 = vmatprep.subr.bf16.mxu0 0
    %1071 = vmatpush1.bf16.xpose.msra.mxu0 0
    %1072 = vmatprep.subr.bf16.mxu0 0
    %1073 = vmatpush1.bf16.xpose.msra.mxu0 0
    %1074 = vmatprep.subr.bf16.mxu0 0
    %1075 = vmatpush1.bf16.xpose.msra.mxu0 0
    %1076 = vmatprep.subr.bf16.mxu0 0
    %1077 = vmatpush1.bf16.xpose.msra.mxu0 %v1060
    %1078 = vmatprep.subr.bf16.mxu0 0
    %1079 = vmatpush2.bf16.xpose.msra.mxu0 0
    %1080 = vmatprep.subr.bf16.mxu0 0
    %1081 = vmatpush2.bf16.xpose.msra.mxu0 0
    %1082 = vmatprep.subr.bf16.mxu0 0
    %1083 = vmatpush2.bf16.xpose.msra.mxu0 0
    %1084 = vmatprep.subr.bf16.mxu0 0
    %1085 = vmatpush2.bf16.xpose.msra.mxu0 0
    %1086 = vmatprep.subr.bf16.mxu0 0
    %1087 = vmatpush2.bf16.xpose.msra.mxu0 0
    %1088 = vmatprep.subr.bf16.mxu0 0
    %1089 = vmatpush2.bf16.xpose.msra.mxu0 0
    %1090 = vmatprep.subr.bf16.mxu0 0
    %1091 = vmatpush2.bf16.xpose.msra.mxu0 0
    %1092 = vmatprep.subr.bf16.mxu0 0
    %1093 = vmatpush2.bf16.xpose.msra.mxu0 0
    %1094 = vmatprep.mubr.bf16.mxu0 0
    %1095 = vmatmul.mubr.bf16.gmra.mxu0 %v1057
    %v1096 = vpop.f32.mrf.mxu0
    %v1097 = vadd.f32 %v122, %v1096
    %v1098 = vpop.f32.mrf.mxu0
    %v1099 = vpop.f32.mrf.mxu0
    %v1100 = vpop.f32.mrf.mxu0
    %1101 = vdwg.mxu0
    %v1102 = vsel %vm249, %v1097, -inf
    %1103 = vmax.xlane.f32.xlu0 %v1102
    %v1104 = vpop.xlane.xlu0 %1103
    %v1105 = vsub.f32 %v1097, %v1104
    %v1106 = vmul.f32 %v1105, 1.442695
    %v1107 = vpow.pop %v1106
    %v1108 = vsel %vm249, %v1107, 0.0
    %1109 = vadd.xlane.f32.xlu0 %v1108
    %v1110 = vpop.xlane.xlu0 %1109
    %v1111 = vrcp.pop %v1110
    %v1112 = vmul.f32 %v1107, %v1111
    %v1113 = vpack.c.bf16 %v1112, %v1112
    %1114 = vrot.lane.b32.xlu0 %v1052, 96
    %v1115 = vpop.permute.xlu0 %1114
    %v1117 = vsel %vm249, %v1113, 0
    %v1120 = vsel %vm267, %v1115, 0
    %1122 = vmatprep.subr.bf16.mxu0 0
    %1123 = vmatpush1.bf16.msra.mxu0 0
    %1124 = vmatprep.subr.bf16.mxu0 0
    %1125 = vmatpush1.bf16.msra.mxu0 0
    %1126 = vmatprep.subr.bf16.mxu0 0
    %1127 = vmatpush1.bf16.msra.mxu0 0
    %1128 = vmatprep.subr.bf16.mxu0 0
    %1129 = vmatpush1.bf16.msra.mxu0 0
    %1130 = vmatprep.subr.bf16.mxu0 0
    %1131 = vmatpush1.bf16.msra.mxu0 0
    %1132 = vmatprep.subr.bf16.mxu0 0
    %1133 = vmatpush1.bf16.msra.mxu0 0
    %1134 = vmatprep.subr.bf16.mxu0 0
    %1135 = vmatpush1.bf16.msra.mxu0 0
    %1136 = vmatprep.subr.bf16.mxu0 0
    %1137 = vmatpush1.bf16.msra.mxu0 %v1120
    %1138 = vmatprep.subr.bf16.mxu0 0
    %1139 = vmatpush2.bf16.msra.mxu0 0
    %1140 = vmatprep.subr.bf16.mxu0 0
    %1141 = vmatpush2.bf16.msra.mxu0 0
    %1142 = vmatprep.subr.bf16.mxu0 0
    %1143 = vmatpush2.bf16.msra.mxu0 0
    %1144 = vmatprep.subr.bf16.mxu0 0
    %1145 = vmatpush2.bf16.msra.mxu0 0
    %1146 = vmatprep.subr.bf16.mxu0 0
    %1147 = vmatpush2.bf16.msra.mxu0 0
    %1148 = vmatprep.subr.bf16.mxu0 0
    %1149 = vmatpush2.bf16.msra.mxu0 0
    %1150 = vmatprep.subr.bf16.mxu0 0
    %1151 = vmatpush2.bf16.msra.mxu0 0
    %1152 = vmatprep.subr.bf16.mxu0 0
    %1153 = vmatpush2.bf16.msra.mxu0 0
    %1154 = vmatprep.mubr.bf16.mxu0 0
    %1155 = vmatmul.mubr.bf16.gmra.mxu0 %v1117
    %v1156 = vpop.f32.mrf.mxu0
    %v1157 = vadd.f32 0.0, %v1156
    %v1158 = vpop.f32.mrf.mxu0
    %v1159 = vpop.f32.mrf.mxu0
    %v1160 = vpop.f32.mrf.mxu0
    %1161 = vdwg.mxu0
    %1162 = vrot.lane.b32.xlu0 %v1052, 80
    %v1163 = vpop.permute.xlu0 %1162
    %1164 = vrot.lane.b32.xlu0 %v1052, 64
    %v1165 = vpop.permute.xlu0 %1164
    %v1167 = vsel %vm202, %v1163, 0
    %v1170 = vsel %vm202, %v1165, 0
    %1172 = vmatprep.subr.bf16.mxu0 0
    %1173 = vmatpush1.bf16.xpose.msra.mxu0 0
    %1174 = vmatprep.subr.bf16.mxu0 0
    %1175 = vmatpush1.bf16.xpose.msra.mxu0 0
    %1176 = vmatprep.subr.bf16.mxu0 0
    %1177 = vmatpush1.bf16.xpose.msra.mxu0 0
    %1178 = vmatprep.subr.bf16.mxu0 0
    %1179 = vmatpush1.bf16.xpose.msra.mxu0 0
    %1180 = vmatprep.subr.bf16.mxu0 0
    %1181 = vmatpush1.bf16.xpose.msra.mxu0 0
    %1182 = vmatprep.subr.bf16.mxu0 0
    %1183 = vmatpush1.bf16.xpose.msra.mxu0 0
    %1184 = vmatprep.subr.bf16.mxu0 0
    %1185 = vmatpush1.bf16.xpose.msra.mxu0 0
    %1186 = vmatprep.subr.bf16.mxu0 0
    %1187 = vmatpush1.bf16.xpose.msra.mxu0 %v1170
    %1188 = vmatprep.subr.bf16.mxu0 0
    %1189 = vmatpush2.bf16.xpose.msra.mxu0 0
    %1190 = vmatprep.subr.bf16.mxu0 0
    %1191 = vmatpush2.bf16.xpose.msra.mxu0 0
    %1192 = vmatprep.subr.bf16.mxu0 0
    %1193 = vmatpush2.bf16.xpose.msra.mxu0 0
    %1194 = vmatprep.subr.bf16.mxu0 0
    %1195 = vmatpush2.bf16.xpose.msra.mxu0 0
    %1196 = vmatprep.subr.bf16.mxu0 0
    %1197 = vmatpush2.bf16.xpose.msra.mxu0 0
    %1198 = vmatprep.subr.bf16.mxu0 0
    %1199 = vmatpush2.bf16.xpose.msra.mxu0 0
    %1200 = vmatprep.subr.bf16.mxu0 0
    %1201 = vmatpush2.bf16.xpose.msra.mxu0 0
    %1202 = vmatprep.subr.bf16.mxu0 0
    %1203 = vmatpush2.bf16.xpose.msra.mxu0 0
    %1204 = vmatprep.mubr.bf16.mxu0 0
    %1205 = vmatmul.mubr.bf16.gmra.mxu0 %v1167
    %v1206 = vpop.f32.mrf.mxu0
    %v1207 = vadd.f32 %v122, %v1206
    %v1208 = vpop.f32.mrf.mxu0
    %v1209 = vpop.f32.mrf.mxu0
    %v1210 = vpop.f32.mrf.mxu0
    %1211 = vdwg.mxu0
    %v1212 = vsel %vm249, %v1207, -inf
    %1213 = vmax.xlane.f32.xlu0 %v1212
    %v1214 = vpop.xlane.xlu0 %1213
    %v1215 = vsub.f32 %v1207, %v1214
    %v1216 = vmul.f32 %v1215, 1.442695
    %v1217 = vpow.pop %v1216
    %v1218 = vsel %vm249, %v1217, 0.0
    %1219 = vadd.xlane.f32.xlu0 %v1218
    %v1220 = vpop.xlane.xlu0 %1219
    %v1221 = vrcp.pop %v1220
    %v1222 = vmul.f32 %v1217, %v1221
    %v1223 = vpack.c.bf16 %v1222, %v1222
    %1224 = vrot.lane.b32.xlu0 %v1052, 48
    %v1225 = vpop.permute.xlu0 %1224
    %v1227 = vsel %vm249, %v1223, 0
    %v1230 = vsel %vm267, %v1225, 0
    %1232 = vmatprep.subr.bf16.mxu0 0
    %1233 = vmatpush1.bf16.msra.mxu0 0
    %1234 = vmatprep.subr.bf16.mxu0 0
    %1235 = vmatpush1.bf16.msra.mxu0 0
    %1236 = vmatprep.subr.bf16.mxu0 0
    %1237 = vmatpush1.bf16.msra.mxu0 0
    %1238 = vmatprep.subr.bf16.mxu0 0
    %1239 = vmatpush1.bf16.msra.mxu0 0
    %1240 = vmatprep.subr.bf16.mxu0 0
    %1241 = vmatpush1.bf16.msra.mxu0 0
    %1242 = vmatprep.subr.bf16.mxu0 0
    %1243 = vmatpush1.bf16.msra.mxu0 0
    %1244 = vmatprep.subr.bf16.mxu0 0
    %1245 = vmatpush1.bf16.msra.mxu0 0
    %1246 = vmatprep.subr.bf16.mxu0 0
    %1247 = vmatpush1.bf16.msra.mxu0 %v1230
    %1248 = vmatprep.subr.bf16.mxu0 0
    %1249 = vmatpush2.bf16.msra.mxu0 0
    %1250 = vmatprep.subr.bf16.mxu0 0
    %1251 = vmatpush2.bf16.msra.mxu0 0
    %1252 = vmatprep.subr.bf16.mxu0 0
    %1253 = vmatpush2.bf16.msra.mxu0 0
    %1254 = vmatprep.subr.bf16.mxu0 0
    %1255 = vmatpush2.bf16.msra.mxu0 0
    %1256 = vmatprep.subr.bf16.mxu0 0
    %1257 = vmatpush2.bf16.msra.mxu0 0
    %1258 = vmatprep.subr.bf16.mxu0 0
    %1259 = vmatpush2.bf16.msra.mxu0 0
    %1260 = vmatprep.subr.bf16.mxu0 0
    %1261 = vmatpush2.bf16.msra.mxu0 0
    %1262 = vmatprep.subr.bf16.mxu0 0
    %1263 = vmatpush2.bf16.msra.mxu0 0
    %1264 = vmatprep.mubr.bf16.mxu0 0
    %1265 = vmatmul.mubr.bf16.gmra.mxu0 %v1227
    %v1266 = vpop.f32.mrf.mxu0
    %v1267 = vadd.f32 0.0, %v1266
    %v1268 = vpop.f32.mrf.mxu0
    %v1269 = vpop.f32.mrf.mxu0
    %v1270 = vpop.f32.mrf.mxu0
    %1271 = vdwg.mxu0
    %1273 = vrot.lane.b32.xlu0 %v1267, 16
    %v1274 = vpop.permute.xlu0 %1273
    %v1276 = vsel %vm202, %v1157, %v1274
    %v1277 = vpack.c.bf16 %v1049, %v1049
    %1279 = vrot.lane.b32.xlu0 %v1277, 112
    %v1280 = vpop.permute.xlu0 %1279
    %v1282 = vsel %vm202, %v1277, 0
    %v1285 = vsel %vm202, %v1280, 0
    %1287 = vmatprep.subr.bf16.mxu0 0
    %1288 = vmatpush1.bf16.xpose.msra.mxu0 0
    %1289 = vmatprep.subr.bf16.mxu0 0
    %1290 = vmatpush1.bf16.xpose.msra.mxu0 0
    %1291 = vmatprep.subr.bf16.mxu0 0
    %1292 = vmatpush1.bf16.xpose.msra.mxu0 0
    %1293 = vmatprep.subr.bf16.mxu0 0
    %1294 = vmatpush1.bf16.xpose.msra.mxu0 0
    %1295 = vmatprep.subr.bf16.mxu0 0
    %1296 = vmatpush1.bf16.xpose.msra.mxu0 0
    %1297 = vmatprep.subr.bf16.mxu0 0
    %1298 = vmatpush1.bf16.xpose.msra.mxu0 0
    %1299 = vmatprep.subr.bf16.mxu0 0
    %1300 = vmatpush1.bf16.xpose.msra.mxu0 0
    %1301 = vmatprep.subr.bf16.mxu0 0
    %1302 = vmatpush1.bf16.xpose.msra.mxu0 %v1285
    %1303 = vmatprep.subr.bf16.mxu0 0
    %1304 = vmatpush2.bf16.xpose.msra.mxu0 0
    %1305 = vmatprep.subr.bf16.mxu0 0
    %1306 = vmatpush2.bf16.xpose.msra.mxu0 0
    %1307 = vmatprep.subr.bf16.mxu0 0
    %1308 = vmatpush2.bf16.xpose.msra.mxu0 0
    %1309 = vmatprep.subr.bf16.mxu0 0
    %1310 = vmatpush2.bf16.xpose.msra.mxu0 0
    %1311 = vmatprep.subr.bf16.mxu0 0
    %1312 = vmatpush2.bf16.xpose.msra.mxu0 0
    %1313 = vmatprep.subr.bf16.mxu0 0
    %1314 = vmatpush2.bf16.xpose.msra.mxu0 0
    %1315 = vmatprep.subr.bf16.mxu0 0
    %1316 = vmatpush2.bf16.xpose.msra.mxu0 0
    %1317 = vmatprep.subr.bf16.mxu0 0
    %1318 = vmatpush2.bf16.xpose.msra.mxu0 0
    %1319 = vmatprep.mubr.bf16.mxu0 0
    %1320 = vmatmul.mubr.bf16.gmra.mxu0 %v1282
    %v1321 = vpop.f32.mrf.mxu0
    %v1322 = vadd.f32 %v128, %v1321
    %v1323 = vpop.f32.mrf.mxu0
    %v1324 = vpop.f32.mrf.mxu0
    %v1325 = vpop.f32.mrf.mxu0
    %1326 = vdwg.mxu0
    %v1327 = vsel %vm249, %v1322, -inf
    %1328 = vmax.xlane.f32.xlu0 %v1327
    %v1329 = vpop.xlane.xlu0 %1328
    %v1330 = vsub.f32 %v1322, %v1329
    %v1331 = vmul.f32 %v1330, 1.442695
    %v1332 = vpow.pop %v1331
    %v1333 = vsel %vm249, %v1332, 0.0
    %1334 = vadd.xlane.f32.xlu0 %v1333
    %v1335 = vpop.xlane.xlu0 %1334
    %v1336 = vrcp.pop %v1335
    %v1337 = vmul.f32 %v1332, %v1336
    %v1338 = vpack.c.bf16 %v1337, %v1337
    %1339 = vrot.lane.b32.xlu0 %v1277, 96
    %v1340 = vpop.permute.xlu0 %1339
    %v1342 = vsel %vm249, %v1338, 0
    %v1345 = vsel %vm267, %v1340, 0
    %1347 = vmatprep.subr.bf16.mxu0 0
    %1348 = vmatpush1.bf16.msra.mxu0 0
    %1349 = vmatprep.subr.bf16.mxu0 0
    %1350 = vmatpush1.bf16.msra.mxu0 0
    %1351 = vmatprep.subr.bf16.mxu0 0
    %1352 = vmatpush1.bf16.msra.mxu0 0
    %1353 = vmatprep.subr.bf16.mxu0 0
    %1354 = vmatpush1.bf16.msra.mxu0 0
    %1355 = vmatprep.subr.bf16.mxu0 0
    %1356 = vmatpush1.bf16.msra.mxu0 0
    %1357 = vmatprep.subr.bf16.mxu0 0
    %1358 = vmatpush1.bf16.msra.mxu0 0
    %1359 = vmatprep.subr.bf16.mxu0 0
    %1360 = vmatpush1.bf16.msra.mxu0 0
    %1361 = vmatprep.subr.bf16.mxu0 0
    %1362 = vmatpush1.bf16.msra.mxu0 %v1345
    %1363 = vmatprep.subr.bf16.mxu0 0
    %1364 = vmatpush2.bf16.msra.mxu0 0
    %1365 = vmatprep.subr.bf16.mxu0 0
    %1366 = vmatpush2.bf16.msra.mxu0 0
    %1367 = vmatprep.subr.bf16.mxu0 0
    %1368 = vmatpush2.bf16.msra.mxu0 0
    %1369 = vmatprep.subr.bf16.mxu0 0
    %1370 = vmatpush2.bf16.msra.mxu0 0
    %1371 = vmatprep.subr.bf16.mxu0 0
    %1372 = vmatpush2.bf16.msra.mxu0 0
    %1373 = vmatprep.subr.bf16.mxu0 0
    %1374 = vmatpush2.bf16.msra.mxu0 0
    %1375 = vmatprep.subr.bf16.mxu0 0
    %1376 = vmatpush2.bf16.msra.mxu0 0
    %1377 = vmatprep.subr.bf16.mxu0 0
    %1378 = vmatpush2.bf16.msra.mxu0 0
    %1379 = vmatprep.mubr.bf16.mxu0 0
    %1380 = vmatmul.mubr.bf16.gmra.mxu0 %v1342
    %v1381 = vpop.f32.mrf.mxu0
    %v1382 = vadd.f32 0.0, %v1381
    %v1383 = vpop.f32.mrf.mxu0
    %v1384 = vpop.f32.mrf.mxu0
    %v1385 = vpop.f32.mrf.mxu0
    %1386 = vdwg.mxu0
    %1387 = vrot.lane.b32.xlu0 %v1277, 80
    %v1388 = vpop.permute.xlu0 %1387
    %1389 = vrot.lane.b32.xlu0 %v1277, 64
    %v1390 = vpop.permute.xlu0 %1389
    %v1392 = vsel %vm202, %v1388, 0
    %v1395 = vsel %vm202, %v1390, 0
    %1397 = vmatprep.subr.bf16.mxu0 0
    %1398 = vmatpush1.bf16.xpose.msra.mxu0 0
    %1399 = vmatprep.subr.bf16.mxu0 0
    %1400 = vmatpush1.bf16.xpose.msra.mxu0 0
    %1401 = vmatprep.subr.bf16.mxu0 0
    %1402 = vmatpush1.bf16.xpose.msra.mxu0 0
    %1403 = vmatprep.subr.bf16.mxu0 0
    %1404 = vmatpush1.bf16.xpose.msra.mxu0 0
    %1405 = vmatprep.subr.bf16.mxu0 0
    %1406 = vmatpush1.bf16.xpose.msra.mxu0 0
    %1407 = vmatprep.subr.bf16.mxu0 0
    %1408 = vmatpush1.bf16.xpose.msra.mxu0 0
    %1409 = vmatprep.subr.bf16.mxu0 0
    %1410 = vmatpush1.bf16.xpose.msra.mxu0 0
    %1411 = vmatprep.subr.bf16.mxu0 0
    %1412 = vmatpush1.bf16.xpose.msra.mxu0 %v1395
    %1413 = vmatprep.subr.bf16.mxu0 0
    %1414 = vmatpush2.bf16.xpose.msra.mxu0 0
    %1415 = vmatprep.subr.bf16.mxu0 0
    %1416 = vmatpush2.bf16.xpose.msra.mxu0 0
    %1417 = vmatprep.subr.bf16.mxu0 0
    %1418 = vmatpush2.bf16.xpose.msra.mxu0 0
    %1419 = vmatprep.subr.bf16.mxu0 0
    %1420 = vmatpush2.bf16.xpose.msra.mxu0 0
    %1421 = vmatprep.subr.bf16.mxu0 0
    %1422 = vmatpush2.bf16.xpose.msra.mxu0 0
    %1423 = vmatprep.subr.bf16.mxu0 0
    %1424 = vmatpush2.bf16.xpose.msra.mxu0 0
    %1425 = vmatprep.subr.bf16.mxu0 0
    %1426 = vmatpush2.bf16.xpose.msra.mxu0 0
    %1427 = vmatprep.subr.bf16.mxu0 0
    %1428 = vmatpush2.bf16.xpose.msra.mxu0 0
    %1429 = vmatprep.mubr.bf16.mxu0 0
    %1430 = vmatmul.mubr.bf16.gmra.mxu0 %v1392
    %v1431 = vpop.f32.mrf.mxu0
    %v1432 = vadd.f32 %v128, %v1431
    %v1433 = vpop.f32.mrf.mxu0
    %v1434 = vpop.f32.mrf.mxu0
    %v1435 = vpop.f32.mrf.mxu0
    %1436 = vdwg.mxu0
    %v1437 = vsel %vm249, %v1432, -inf
    %1438 = vmax.xlane.f32.xlu0 %v1437
    %v1439 = vpop.xlane.xlu0 %1438
    %v1440 = vsub.f32 %v1432, %v1439
    %v1441 = vmul.f32 %v1440, 1.442695
    %v1442 = vpow.pop %v1441
    %v1443 = vsel %vm249, %v1442, 0.0
    %1444 = vadd.xlane.f32.xlu0 %v1443
    %v1445 = vpop.xlane.xlu0 %1444
    %v1446 = vrcp.pop %v1445
    %v1447 = vmul.f32 %v1442, %v1446
    %v1448 = vpack.c.bf16 %v1447, %v1447
    %1449 = vrot.lane.b32.xlu0 %v1277, 48
    %v1450 = vpop.permute.xlu0 %1449
    %v1452 = vsel %vm249, %v1448, 0
    %v1455 = vsel %vm267, %v1450, 0
    %1457 = vmatprep.subr.bf16.mxu0 0
    %1458 = vmatpush1.bf16.msra.mxu0 0
    %1459 = vmatprep.subr.bf16.mxu0 0
    %1460 = vmatpush1.bf16.msra.mxu0 0
    %1461 = vmatprep.subr.bf16.mxu0 0
    %1462 = vmatpush1.bf16.msra.mxu0 0
    %1463 = vmatprep.subr.bf16.mxu0 0
    %1464 = vmatpush1.bf16.msra.mxu0 0
    %1465 = vmatprep.subr.bf16.mxu0 0
    %1466 = vmatpush1.bf16.msra.mxu0 0
    %1467 = vmatprep.subr.bf16.mxu0 0
    %1468 = vmatpush1.bf16.msra.mxu0 0
    %1469 = vmatprep.subr.bf16.mxu0 0
    %1470 = vmatpush1.bf16.msra.mxu0 0
    %1471 = vmatprep.subr.bf16.mxu0 0
    %1472 = vmatpush1.bf16.msra.mxu0 %v1455
    %1473 = vmatprep.subr.bf16.mxu0 0
    %1474 = vmatpush2.bf16.msra.mxu0 0
    %1475 = vmatprep.subr.bf16.mxu0 0
    %1476 = vmatpush2.bf16.msra.mxu0 0
    %1477 = vmatprep.subr.bf16.mxu0 0
    %1478 = vmatpush2.bf16.msra.mxu0 0
    %1479 = vmatprep.subr.bf16.mxu0 0
    %1480 = vmatpush2.bf16.msra.mxu0 0
    %1481 = vmatprep.subr.bf16.mxu0 0
    %1482 = vmatpush2.bf16.msra.mxu0 0
    %1483 = vmatprep.subr.bf16.mxu0 0
    %1484 = vmatpush2.bf16.msra.mxu0 0
    %1485 = vmatprep.subr.bf16.mxu0 0
    %1486 = vmatpush2.bf16.msra.mxu0 0
    %1487 = vmatprep.subr.bf16.mxu0 0
    %1488 = vmatpush2.bf16.msra.mxu0 0
    %1489 = vmatprep.mubr.bf16.mxu0 0
    %1490 = vmatmul.mubr.bf16.gmra.mxu0 %v1452
    %v1491 = vpop.f32.mrf.mxu0
    %v1492 = vadd.f32 0.0, %v1491
    %v1493 = vpop.f32.mrf.mxu0
    %v1494 = vpop.f32.mrf.mxu0
    %v1495 = vpop.f32.mrf.mxu0
    %1496 = vdwg.mxu0
    %1498 = vrot.lane.b32.xlu0 %v1492, 16
    %v1499 = vpop.permute.xlu0 %1498
    %v1501 = vsel %vm202, %v1382, %v1499
    %v1502 = vpack.c.bf16 %v1501, %v1276
    %s1503 = scalar_lea.vmem %s6, 16
    %v1504 = vld [vmem:[%s1503] sm:$0xf]
    %v1505 = vld [vmem:[%s1503 + $0x4] sm:$0xf]
    %v1506 = vld [vmem:[%s1503 + $0x8] sm:$0xf]
    %v1507 = vld [vmem:[%s1503 + $0xc] sm:$0xf]
    %s1508 = scalar_lea.vmem %s7, 1
    %v1509 = vld [vmem:[%s1508] sm:$0x1]
    %v1511 = vlaneseq
    %v1512 = vshrl.u32 %v1511, 7
    %v1513 = vsub.s32 0, %v1512
    %v1514 = vrot.slane %v1509, %v1513
    %v1520 = vunpack.c.l.b16 %v1504
    %v1521 = vunpack.c.l.b16 %v1505
    %v1522 = vunpack.c.l.b16 %v1506
    %v1523 = vunpack.c.l.b16 %v1507
    %v1524 = vpack.c.b16 %v1521, %v1520
    %v1525 = vpack.c.b16 %v1523, %v1522
    %v1529 = vsel %vm68, %v1502, 0
    %1531 = vmatprep.subr.bf16.mxu0 0
    %1532 = vmatpush1.bf16.msra.mxu0 0
    %1533 = vmatprep.subr.bf16.mxu0 0
    %1534 = vmatpush1.bf16.msra.mxu0 0
    %1535 = vmatprep.subr.bf16.mxu0 0
    %1536 = vmatpush1.bf16.msra.mxu0 0
    %1537 = vmatprep.subr.bf16.mxu0 0
    %1538 = vmatpush1.bf16.msra.mxu0 0
    %1539 = vmatprep.subr.bf16.mxu0 0
    %1540 = vmatpush1.bf16.msra.mxu0 0
    %1541 = vmatprep.subr.bf16.mxu0 0
    %1542 = vmatpush1.bf16.msra.mxu0 0
    %1543 = vmatprep.subr.bf16.mxu0 0
    %1544 = vmatpush1.bf16.msra.mxu0 %v1525
    %1545 = vmatprep.subr.bf16.mxu0 0
    %1546 = vmatpush1.bf16.msra.mxu0 %v1524
    %1547 = vmatprep.subr.bf16.mxu0 0
    %1548 = vmatpush2.bf16.msra.mxu0 0
    %1549 = vmatprep.subr.bf16.mxu0 0
    %1550 = vmatpush2.bf16.msra.mxu0 0
    %1551 = vmatprep.subr.bf16.mxu0 0
    %1552 = vmatpush2.bf16.msra.mxu0 0
    %1553 = vmatprep.subr.bf16.mxu0 0
    %1554 = vmatpush2.bf16.msra.mxu0 0
    %1555 = vmatprep.subr.bf16.mxu0 0
    %1556 = vmatpush2.bf16.msra.mxu0 0
    %1557 = vmatprep.subr.bf16.mxu0 0
    %1558 = vmatpush2.bf16.msra.mxu0 0
    %1559 = vmatprep.subr.bf16.mxu0 0
    %1560 = vmatpush2.bf16.msra.mxu0 0
    %1561 = vmatprep.subr.bf16.mxu0 0
    %1562 = vmatpush2.bf16.msra.mxu0 0
    %1563 = vmatprep.mubr.bf16.mxu0 0
    %1564 = vmatmul.mubr.bf16.gmra.mxu0 %v1529
    %v1565 = vpop.f32.mrf.mxu0
    %v1566 = vadd.f32 %v1514, %v1565
    %v1567 = vpop.f32.mrf.mxu0
    %v1568 = vpop.f32.mrf.mxu0
    %v1569 = vadd.f32 %v1514, %v1568
    %v1570 = vpop.f32.mrf.mxu0
    %1571 = vdwg.mxu0
    %v1572 = vadd.f32 %v1566, %v980
    %v1573 = vadd.f32 %v1569, %v981
    %s1574 = scalar_lea.vmem %s8, 1
    %v1575 = vld [vmem:[%s1574] sm:$0x1]
    %s1576 = scalar_lea.vmem %s9, 1
    %v1577 = vld [vmem:[%s1576] sm:$0x1]
    %v1578 = vsel %vm68, %v1572, 0.0
    %1579 = vadd.xlane.f32.xlu0 %v1578
    %v1580 = vpop.xlane.xlu0 %1579
    %v1581 = vsel %vm68, %v1573, 0.0
    %1582 = vadd.xlane.f32.xlu0 %v1581
    %v1583 = vpop.xlane.xlu0 %1582
    %v1584 = vmul.f32 %v1580, %v75
    %v1585 = vmul.f32 %v1583, %v75
    %v1586 = vsub.f32 %v1572, %v1584
    %v1587 = vsub.f32 %v1573, %v1585
    %v1588 = vmul.f32 %v1586, %v1586
    %v1589 = vmul.f32 %v1587, %v1587
    %v1590 = vsel %vm68, %v1588, 0.0
    %1591 = vadd.xlane.f32.xlu0 %v1590
    %v1592 = vpop.xlane.xlu0 %1591
    %v1593 = vsel %vm68, %v1589, 0.0
    %1594 = vadd.xlane.f32.xlu0 %v1593
    %v1595 = vpop.xlane.xlu0 %1594
    %v1596 = vmul.f32 %v1592, %v75
    %v1597 = vmul.f32 %v1595, %v75
    %v1598 = vadd.f32 %v1596, 1e-12
    %v1599 = vadd.f32 %v1597, 1e-12
    %v1600 = vrsqrt.pop %v1598
    %v1601 = vrsqrt.pop %v1599
    %v1602 = vmul.f32 %v1586, %v1600
    %v1603 = vmul.f32 %v1587, %v1601
    %v1605 = vlaneseq
    %v1606 = vshrl.u32 %v1605, 7
    %v1607 = vsub.s32 0, %v1606
    %v1608 = vrot.slane %v1575, %v1607
    %v1610 = vmul.f32 %v1602, %v1608
    %v1611 = vmul.f32 %v1603, %v1608
    %v1613 = vlaneseq
    %v1614 = vshrl.u32 %v1613, 7
    %v1615 = vsub.s32 0, %v1614
    %v1616 = vrot.slane %v1577, %v1615
    %v1618 = vadd.f32 %v1610, %v1616
    %v1619 = vadd.f32 %v1611, %v1616
    %v1620 = vpack.c.bf16 %v1619, %v1618
    %s1621 = scalar_lea.vmem %s10, 16
    %v1622 = vld [vmem:[%s1621] sm:$0xf]
    %v1623 = vld [vmem:[%s1621 + $0x4] sm:$0xf]
    %v1624 = vld [vmem:[%s1621 + $0x8] sm:$0xf]
    %v1625 = vld [vmem:[%s1621 + $0xc] sm:$0xf]
    %s1626 = scalar_lea.vmem %s11, 1
    %v1627 = vld [vmem:[%s1626] sm:$0x1]
    %v1629 = vlaneseq
    %v1630 = vshrl.u32 %v1629, 7
    %v1631 = vsub.s32 0, %v1630
    %v1632 = vrot.slane %v1627, %v1631
    %v1638 = vunpack.c.l.b16 %v1622
    %v1639 = vunpack.c.l.b16 %v1623
    %v1640 = vunpack.c.l.b16 %v1624
    %v1641 = vunpack.c.l.b16 %v1625
    %v1642 = vpack.c.b16 %v1639, %v1638
    %v1643 = vpack.c.b16 %v1641, %v1640
    %v1647 = vsel %vm68, %v1620, 0
    %1649 = vmatprep.subr.bf16.mxu0 0
    %1650 = vmatpush1.bf16.msra.mxu0 0
    %1651 = vmatprep.subr.bf16.mxu0 0
    %1652 = vmatpush1.bf16.msra.mxu0 0
    %1653 = vmatprep.subr.bf16.mxu0 0
    %1654 = vmatpush1.bf16.msra.mxu0 0
    %1655 = vmatprep.subr.bf16.mxu0 0
    %1656 = vmatpush1.bf16.msra.mxu0 0
    %1657 = vmatprep.subr.bf16.mxu0 0
    %1658 = vmatpush1.bf16.msra.mxu0 0
    %1659 = vmatprep.subr.bf16.mxu0 0
    %1660 = vmatpush1.bf16.msra.mxu0 0
    %1661 = vmatprep.subr.bf16.mxu0 0
    %1662 = vmatpush1.bf16.msra.mxu0 %v1643
    %1663 = vmatprep.subr.bf16.mxu0 0
    %1664 = vmatpush1.bf16.msra.mxu0 %v1642
    %1665 = vmatprep.subr.bf16.mxu0 0
    %1666 = vmatpush2.bf16.msra.mxu0 0
    %1667 = vmatprep.subr.bf16.mxu0 0
    %1668 = vmatpush2.bf16.msra.mxu0 0
    %1669 = vmatprep.subr.bf16.mxu0 0
    %1670 = vmatpush2.bf16.msra.mxu0 0
    %1671 = vmatprep.subr.bf16.mxu0 0
    %1672 = vmatpush2.bf16.msra.mxu0 0
    %1673 = vmatprep.subr.bf16.mxu0 0
    %1674 = vmatpush2.bf16.msra.mxu0 0
    %1675 = vmatprep.subr.bf16.mxu0 0
    %1676 = vmatpush2.bf16.msra.mxu0 0
    %1677 = vmatprep.subr.bf16.mxu0 0
    %1678 = vmatpush2.bf16.msra.mxu0 0
    %1679 = vmatprep.subr.bf16.mxu0 0
    %1680 = vmatpush2.bf16.msra.mxu0 0
    %1681 = vmatprep.mubr.bf16.mxu0 0
    %1682 = vmatmul.mubr.bf16.gmra.mxu0 %v1647
    %v1683 = vpop.f32.mrf.mxu0
    %v1684 = vadd.f32 %v1632, %v1683
    %v1685 = vpop.f32.mrf.mxu0
    %v1686 = vpop.f32.mrf.mxu0
    %v1687 = vadd.f32 %v1632, %v1686
    %v1688 = vpop.f32.mrf.mxu0
    %1689 = vdwg.mxu0
    %v1690 = vmul.f32 %v1684, %v1684
    %v1691 = vmul.f32 %v1687, %v1687
    %v1692 = vmul.f32 %v1684, %v1690
    %v1693 = vmul.f32 %v1687, %v1691
    %v1694 = vmul.f32 %v1692, 0.044715
    %v1695 = vmul.f32 %v1693, 0.044715
    %v1696 = vadd.f32 %v1684, %v1694
    %v1697 = vadd.f32 %v1687, %v1695
    %v1698 = vmul.f32 %v1696, 0.7978846
    %v1699 = vmul.f32 %v1697, 0.7978846
    %v1700 = vtanh.pop %v1698
    %v1701 = vtanh.pop %v1699
    %v1702 = vadd.f32 %v1700, 1.0
    %v1703 = vadd.f32 %v1701, 1.0
    %v1704 = vmul.f32 %v1702, 0.5
    %v1705 = vmul.f32 %v1703, 0.5
    %v1706 = vmul.f32 %v1684, %v1704
    %v1707 = vmul.f32 %v1687, %v1705
    %v1708 = vpack.c.bf16 %v1707, %v1706
    %s1709 = scalar_lea.vmem %s12, 32
    %v1710 = vld [vmem:[%s1709] sm:$0xf]
    %v1711 = vld [vmem:[%s1709 + $0x4] sm:$0xf]
    %v1712 = vld [vmem:[%s1709 + $0x8] sm:$0xf]
    %v1713 = vld [vmem:[%s1709 + $0xc] sm:$0xf]
    %v1714 = vld [vmem:[%s1709 + $0x10] sm:$0xf]
    %v1715 = vld [vmem:[%s1709 + $0x14] sm:$0xf]
    %v1716 = vld [vmem:[%s1709 + $0x18] sm:$0xf]
    %v1717 = vld [vmem:[%s1709 + $0x1c] sm:$0xf]
    %s1718 = scalar_lea.vmem %s13, 1
    %v1719 = vld [vmem:[%s1718] sm:$0x1]
    %v1721 = vlaneseq
    %v1722 = vshrl.u32 %v1721, 7
    %v1723 = vsub.s32 0, %v1722
    %v1724 = vrot.slane %v1719, %v1723
    %v1734 = vunpack.c.l.b16 %v1710
    %v1735 = vunpack.c.l.b16 %v1711
    %v1736 = vunpack.c.l.b16 %v1712
    %v1737 = vunpack.c.l.b16 %v1713
    %v1738 = vunpack.c.l.b16 %v1714
    %v1739 = vunpack.c.l.b16 %v1715
    %v1740 = vunpack.c.l.b16 %v1716
    %v1741 = vunpack.c.l.b16 %v1717
    %v1742 = vpack.c.b16 %v1735, %v1734
    %v1743 = vpack.c.b16 %v1737, %v1736
    %v1744 = vpack.c.b16 %v1739, %v1738
    %v1745 = vpack.c.b16 %v1741, %v1740
    %v1751 = vsel %vm891, %v1708, 0
    %1753 = vmatprep.subr.bf16.mxu0 0
    %1754 = vmatpush1.bf16.msra.mxu0 0
    %1755 = vmatprep.subr.bf16.mxu0 0
    %1756 = vmatpush1.bf16.msra.mxu0 0
    %1757 = vmatprep.subr.bf16.mxu0 0
    %1758 = vmatpush1.bf16.msra.mxu0 0
    %1759 = vmatprep.subr.bf16.mxu0 0
    %1760 = vmatpush1.bf16.msra.mxu0 0
    %1761 = vmatprep.subr.bf16.mxu0 0
    %1762 = vmatpush1.bf16.msra.mxu0 %v1745
    %1763 = vmatprep.subr.bf16.mxu0 0
    %1764 = vmatpush1.bf16.msra.mxu0 %v1744
    %1765 = vmatprep.subr.bf16.mxu0 0
    %1766 = vmatpush1.bf16.msra.mxu0 %v1743
    %1767 = vmatprep.subr.bf16.mxu0 0
    %1768 = vmatpush1.bf16.msra.mxu0 %v1742
    %1769 = vmatprep.subr.bf16.mxu0 0
    %1770 = vmatpush2.bf16.msra.mxu0 0
    %1771 = vmatprep.subr.bf16.mxu0 0
    %1772 = vmatpush2.bf16.msra.mxu0 0
    %1773 = vmatprep.subr.bf16.mxu0 0
    %1774 = vmatpush2.bf16.msra.mxu0 0
    %1775 = vmatprep.subr.bf16.mxu0 0
    %1776 = vmatpush2.bf16.msra.mxu0 0
    %1777 = vmatprep.subr.bf16.mxu0 0
    %1778 = vmatpush2.bf16.msra.mxu0 0
    %1779 = vmatprep.subr.bf16.mxu0 0
    %1780 = vmatpush2.bf16.msra.mxu0 0
    %1781 = vmatprep.subr.bf16.mxu0 0
    %1782 = vmatpush2.bf16.msra.mxu0 0
    %1783 = vmatprep.subr.bf16.mxu0 0
    %1784 = vmatpush2.bf16.msra.mxu0 0
    %1785 = vmatprep.mubr.bf16.mxu0 0
    %1786 = vmatmul.mubr.bf16.gmra.mxu0 %v1751
    %v1787 = vpop.f32.mrf.mxu0
    %v1788 = vadd.f32 %v1724, %v1787
    %v1789 = vpop.f32.mrf.mxu0
    %v1790 = vpop.f32.mrf.mxu0
    %v1791 = vadd.f32 %v1724, %v1790
    %v1792 = vpop.f32.mrf.mxu0
    %1793 = vdwg.mxu0
    %v1794 = vadd.f32 %v1788, %v1618
    %v1795 = vadd.f32 %v1791, %v1619
    %s1796 = scalar_lea.vmem %s14, 1
    %v1797 = vld [vmem:[%s1796] sm:$0x1]
    %s1798 = scalar_lea.vmem %s15, 1
    %v1799 = vld [vmem:[%s1798] sm:$0x1]
    %v1800 = vsel %vm68, %v1794, 0.0
    %1801 = vadd.xlane.f32.xlu0 %v1800
    %v1802 = vpop.xlane.xlu0 %1801
    %v1803 = vsel %vm68, %v1795, 0.0
    %1804 = vadd.xlane.f32.xlu0 %v1803
    %v1805 = vpop.xlane.xlu0 %1804
    %v1806 = vmul.f32 %v1802, %v75
    %v1807 = vmul.f32 %v1805, %v75
    %v1808 = vsub.f32 %v1794, %v1806
    %v1809 = vsub.f32 %v1795, %v1807
    %v1810 = vmul.f32 %v1808, %v1808
    %v1811 = vmul.f32 %v1809, %v1809
    %v1812 = vsel %vm68, %v1810, 0.0
    %1813 = vadd.xlane.f32.xlu0 %v1812
    %v1814 = vpop.xlane.xlu0 %1813
    %v1815 = vsel %vm68, %v1811, 0.0
    %1816 = vadd.xlane.f32.xlu0 %v1815
    %v1817 = vpop.xlane.xlu0 %1816
    %v1818 = vmul.f32 %v1814, %v75
    %v1819 = vmul.f32 %v1817, %v75
    %v1820 = vadd.f32 %v1818, 1e-12
    %v1821 = vadd.f32 %v1819, 1e-12
    %v1822 = vrsqrt.pop %v1820
    %v1823 = vrsqrt.pop %v1821
    %v1824 = vmul.f32 %v1808, %v1822
    %v1825 = vmul.f32 %v1809, %v1823
    %v1827 = vlaneseq
    %v1828 = vshrl.u32 %v1827, 7
    %v1829 = vsub.s32 0, %v1828
    %v1830 = vrot.slane %v1797, %v1829
    %v1832 = vmul.f32 %v1824, %v1830
    %v1833 = vmul.f32 %v1825, %v1830
    %v1835 = vlaneseq
    %v1836 = vshrl.u32 %v1835, 7
    %v1837 = vsub.s32 0, %v1836
    %v1838 = vrot.slane %v1799, %v1837
    %v1840 = vadd.f32 %v1832, %v1838
    %v1841 = vadd.f32 %v1833, %v1838
    %v1843 = vrot.slane %v1841, 7
    %vm1845 = vcmask 1040384
    %v1846 = vsel %vm1845, %v1840, %v1843
    %v1847 = vpack.c.bf16 %v1846, %v1846
    %v1848 = vld [vmem:[%s16] sm:$0xf]
    %v1849 = vld [vmem:[%s16 + $0x4] sm:$0xf]
    %v1850 = vld [vmem:[%s16 + $0x8] sm:$0xf]
    %v1851 = vld [vmem:[%s16 + $0xc] sm:$0xf]
    %v1852 = vld [vmem:[%s17] sm:$0x1]
    %v1854 = vlaneseq
    %v1855 = vshrl.u32 %v1854, 7
    %v1856 = vsub.s32 0, %v1855
    %v1857 = vrot.slane %v1852, %v1856
    %v1863 = vunpack.c.l.b16 %v1848
    %v1864 = vunpack.c.l.b16 %v1849
    %v1865 = vunpack.c.l.b16 %v1850
    %v1866 = vunpack.c.l.b16 %v1851
    %v1867 = vpack.c.b16 %v1864, %v1863
    %v1868 = vpack.c.b16 %v1866, %v1865
    %v1872 = vsel %vm68, %v1847, 0
    %1874 = vmatprep.subr.bf16.mxu0 0
    %1875 = vmatpush1.bf16.msra.mxu0 0
    %1876 = vmatprep.subr.bf16.mxu0 0
    %1877 = vmatpush1.bf16.msra.mxu0 0
    %1878 = vmatprep.subr.bf16.mxu0 0
    %1879 = vmatpush1.bf16.msra.mxu0 0
    %1880 = vmatprep.subr.bf16.mxu0 0
    %1881 = vmatpush1.bf16.msra.mxu0 0
    %1882 = vmatprep.subr.bf16.mxu0 0
    %1883 = vmatpush1.bf16.msra.mxu0 0
    %1884 = vmatprep.subr.bf16.mxu0 0
    %1885 = vmatpush1.bf16.msra.mxu0 0
    %1886 = vmatprep.subr.bf16.mxu0 0
    %1887 = vmatpush1.bf16.msra.mxu0 %v1868
    %1888 = vmatprep.subr.bf16.mxu0 0
    %1889 = vmatpush1.bf16.msra.mxu0 %v1867
    %1890 = vmatprep.subr.bf16.mxu0 0
    %1891 = vmatpush2.bf16.msra.mxu0 0
    %1892 = vmatprep.subr.bf16.mxu0 0
    %1893 = vmatpush2.bf16.msra.mxu0 0
    %1894 = vmatprep.subr.bf16.mxu0 0
    %1895 = vmatpush2.bf16.msra.mxu0 0
    %1896 = vmatprep.subr.bf16.mxu0 0
    %1897 = vmatpush2.bf16.msra.mxu0 0
    %1898 = vmatprep.subr.bf16.mxu0 0
    %1899 = vmatpush2.bf16.msra.mxu0 0
    %1900 = vmatprep.subr.bf16.mxu0 0
    %1901 = vmatpush2.bf16.msra.mxu0 0
    %1902 = vmatprep.subr.bf16.mxu0 0
    %1903 = vmatpush2.bf16.msra.mxu0 0
    %1904 = vmatprep.subr.bf16.mxu0 0
    %1905 = vmatpush2.bf16.msra.mxu0 0
    %1906 = vmatprep.mubr.bf16.mxu0 0
    %1907 = vmatmul.mubr.bf16.gmra.mxu0 %v1872
    %v1908 = vpop.f32.mrf.mxu0
    %v1909 = vadd.f32 %v1857, %v1908
    %v1910 = vpop.f32.mrf.mxu0
    %v1911 = vpop.f32.mrf.mxu0
    %v1912 = vpop.f32.mrf.mxu0
    %1913 = vdwg.mxu0
    %v1914 = vsel %vm68, %v1846, 0.0
    %v1917 = vunpack.c.l.s4 1966171168
    %v1918 = vunpack.c.0.s8 %v1917
    %v1919 = vlaneseq
    %v1920 = vshrl.u32 %v1919, 7
    %v1921 = vsub.s32 %v1918, %v1920
    %v1922 = vrot.slane %v1909, %v1921
    %v1923 = vcombine.high %v1922, %v1922
    %v1925 = vunpack.c.l.s4 1966171168
    %v1926 = vunpack.c.0.s8 %v1925
    %v1927 = vlaneseq
    %v1928 = vshrl.u32 %v1927, 7
    %v1929 = vsub.s32 %v1926, %v1928
    %v1930 = vrot.slane %v1922, %v1929
    %v1932 = vunpack.c.l.s4 1966171168
    %v1933 = vunpack.c.0.s8 %v1932
    %v1934 = vlaneseq
    %v1935 = vshrl.u32 %v1934, 7
    %v1936 = vsub.s32 %v1933, %v1935
    %v1937 = vrot.slane %v1923, %v1936
    %1940 = vst [vmem:[#allocation2] sm:$0x1] %v1930
    %1941 = vst [vmem:[#allocation2 + $0x1] sm:$0x1] %v1937
    %v1944 = vunpack.c.l.s4 1966171168
    %v1945 = vunpack.c.0.s8 %v1944
    %v1946 = vlaneseq
    %v1947 = vshrl.u32 %v1946, 7
    %v1948 = vsub.s32 %v1945, %v1947
    %v1949 = vrot.slane %v1914, %v1948
    %v1950 = vcombine.high %v1949, %v1949
    %v1952 = vunpack.c.l.s4 1966171168
    %v1953 = vunpack.c.0.s8 %v1952
    %v1954 = vlaneseq
    %v1955 = vshrl.u32 %v1954, 7
    %v1956 = vsub.s32 %v1953, %v1955
    %v1957 = vrot.slane %v1949, %v1956
    %v1959 = vunpack.c.l.s4 1966171168
    %v1960 = vunpack.c.0.s8 %v1959
    %v1961 = vlaneseq
    %v1962 = vshrl.u32 %v1961, 7
    %v1963 = vsub.s32 %v1960, %v1962
    %v1964 = vrot.slane %v1950, %v1963
    %1967 = vst [vmem:[#allocation4] sm:$0x1] %v1957
    %1968 = vst [vmem:[#allocation4 + $0x1] sm:$0x1] %v1964
    // Predicated region
    $region74: #{sentiment_bert_forward.1} parent=1 // pred_check
      _
    $region75: #{sentiment_bert_forward.1} parent=1 // pred_check_branch
      %1970 = sbr.rel (0) target = $region77
    $region76: #{sentiment_bert_forward.1} parent=1 // pred_region
      %s1972 = ssub.s32 32, 32
      %1973 = vsyncadd [#allocation3], %s1972
      %s1974 = sshll.u32 [#allocation2], 4
      %s1975 = int_to_ptr.vmem [resolvable:$true] %s1974
      %1980 = dma.vmem_to_hbm [thread:$0]  %s1975, 32, %s18, [#allocation3], 16, 16, 1
    $region77: #{sentiment_bert_forward.1} parent=1 // pred_fallthru
      _
    // Predicated region
    $region78: #{sentiment_bert_forward.1} parent=1 // pred_check
      _
    $region79: #{sentiment_bert_forward.1} parent=1 // pred_check_branch
      %1982 = sbr.rel (0) target = $region81
    $region80: #{sentiment_bert_forward.1} parent=1 // pred_region
      %s1984 = ssub.s32 32, 32
      %1985 = vsyncadd [#allocation5], %s1984
      %s1986 = sshll.u32 [#allocation4], 4
      %s1987 = int_to_ptr.vmem [resolvable:$true] %s1986
      %1992 = dma.vmem_to_hbm [thread:$0]  %s1987, 32, %s19, [#allocation5], 16, 16, 1
    $region81: #{sentiment_bert_forward.1} parent=1 // pred_fallthru
      _
    // Predicated region
    $region82: #{sentiment_bert_forward.1} parent=1 // pred_check
      _
    $region83: #{sentiment_bert_forward.1} parent=1 // pred_check_branch
      %1994 = sbr.rel (0) target = $region85
    $region84: #{sentiment_bert_forward.1} parent=1 // pred_region
      %1995 = dma.done [#allocation3], 32
    $region85: #{sentiment_bert_forward.1} parent=1 // pred_fallthru
      _
    // Predicated region
    $region86: #{sentiment_bert_forward.1} parent=1 // pred_check
      _
    $region87: #{sentiment_bert_forward.1} parent=1 // pred_check_branch
      %1997 = sbr.rel (0) target = $region89
    $region88: #{sentiment_bert_forward.1} parent=1 // pred_region
      %1998 = dma.done [#allocation5], 32
    $region89: #{sentiment_bert_forward.1} parent=1 // pred_fallthru
      _
    %1999 = vsyncpa [#allocation3], 1
    %2000 = vsyncpa [#allocation5], 1

</llo_original>
